<compile_context>
chip_gen: v5e
topology: v5e:2x2
jax: 0.10.0
libtpu: 0.0.40
codegen_flags: <defaults>
</compile_context>

<pallas_src>
import math
from functools import partial

import jax
import jax.numpy as jnp
from jax import lax
from jax.experimental import pallas as pl
from jax.experimental.pallas import tpu as pltpu


def mha_kernel(x_ref, wqkv_ref, bqkv_ref, wp_ref, bp_ref, o_ref,
               qkv_ref, heads_ref, *, num_heads):
    BB, N, E = x_ref.shape
    H = num_heads
    D = E // H
    rows = BB * N

    # ---- fused QKV projection: ONE (rows, E) x (E, 3E) bf16 MXU pass -----------
    x2d = x_ref[...].reshape(rows, E).astype(jnp.bfloat16)
    qkv = jnp.dot(x2d, wqkv_ref[...], preferred_element_type=jnp.float32)
    # bias broadcast happens once, outside all loops (JAX does not CSE broadcasts);
    # result stored once to VMEM in bf16 (MXU-ready operands, half the scratch bytes)
    qkv_ref[...] = (qkv + bqkv_ref[...]).reshape(BB, N, 3 * E).astype(jnp.bfloat16)

    scaling = jnp.float32(E ** 0.5)
    contract_last = (((1,), (1,)), ((), ()))    # q @ k^T without an explicit .T

    # ---- attention: scf.for over the batch block (bounded code size / live ranges
    # even for large batch blocks); heads statically unrolled so head h's softmax
    # (VPU/EUP/XLU) overlaps head h+1's energy matmul (MXU). ----------------------
    @pl.loop(0, BB)
    def _(b):
        head_outs = []
        for h in range(H):
            c0 = h * D
            qh = qkv_ref[b, :, pl.ds(c0, D)]               # (N, D) bf16, ref loads
            kh = qkv_ref[b, :, pl.ds(E + c0, D)]           # (not value slices)
            vh = qkv_ref[b, :, pl.ds(2 * E + c0, D)]

            energy = lax.dot_general(qh, kh, contract_last,
                                     preferred_element_type=jnp.float32)  # (N, N)

            # softmax over keys, THEN divide by sqrt(E) (exactly as the reference);
            # the scale folds into the per-row reciprocal so the (N, N) tile only
            # sees one multiply.  exp / reciprocal kept in f32 (approx=False) so
            # the only precision loss comes from the bf16 MXU operands.
            m = jnp.max(energy, axis=-1, keepdims=True)
            e = jnp.exp(energy - m)
            inv = pl.reciprocal(jnp.sum(e, axis=-1, keepdims=True) * scaling)
            att = (e * inv).astype(jnp.bfloat16)

            head_outs.append(jnp.dot(att, vh, preferred_element_type=jnp.float32))

        # ONE lane-dense (N, E) store per batch element instead of H masked
        # D-wide partial stores.
        heads_ref[b] = jnp.concatenate(head_outs, axis=-1).astype(jnp.bfloat16)

    # ---- fused output projection: ONE (rows, E) x (E, E) bf16 MXU pass ----------
    out = jnp.dot(heads_ref[...].reshape(rows, E), wp_ref[...],
                  preferred_element_type=jnp.float32) + bp_ref[...]
    o_ref[...] = out.reshape(BB, N, E).astype(o_ref.dtype)


def _chip_config():
    """Generation-aware VMEM budget / tiling targets."""
    try:
        kind = jax.devices()[0].device_kind.lower()
    except Exception:  # pragma: no cover - defensive
        kind = ""
    if "v7" in kind:
        # 64 MiB physical VMEM per TensorCore, 2 TensorCores per chip.
        return {"vmem_limit": 48 * 1024 * 1024, "target_rows": 256, "two_cores": True}
    if "v5" in kind or "v6" in kind:
        # 128 MiB physical VMEM, single TensorCore: bigger row blocks, no need
        # to keep >= 2 grid blocks.
        return {"vmem_limit": 64 * 1024 * 1024, "target_rows": 512, "two_cores": False}
    # Unknown chip: conservative defaults.
    return {"vmem_limit": 32 * 1024 * 1024, "target_rows": 256, "two_cores": True}


def _pick_batch_block(B, N, E, *, target_rows, vmem_budget, keep_two_blocks):
    """Batch elements per grid step: enough rows to amortize the ~0.35us/step pipeline
    overhead and feed the MXU a larger M, shrunk until the estimated working set fits
    the per-generation VMEM budget.  On multi-TensorCore chips (v7x) keep >= 2 grid
    blocks so both cores get work."""
    bb = max(1, min(B, max(1, target_rows // max(N, 1))))
    if keep_two_blocks:
        while bb > 1 and B // bb < 2:
            bb -= 1
    while B % bb != 0:
        bb -= 1

    def est(bb_):
        rows = bb_ * N
        x_io = 2 * 2 * rows * E * 4                      # x + out, double-buffered f32
        scratch = rows * 3 * E * 2 + rows * E * 2        # qkv + heads scratch, bf16
        weights = (E * 3 * E + E * E) * 2 + 4 * E * 4    # single-buffered bf16 + biases
        energy = 6 * N * N * 4                           # a few (N,N) f32 temporaries
        return x_io + scratch + weights + energy

    while bb > 1 and est(bb) > vmem_budget:
        bb -= 1
        while B % bb != 0:
            bb -= 1
    return bb


def _mha_call(x, wqkv, bqkv, wp, bp, *, num_heads, batch_block, vmem_limit_bytes,
              weight_buffering=None):
    B, N, E = x.shape
    BB = batch_block
    grid = (B // BB,)

    const2d = lambda i: (0, 0)   # constant blocks: Pallas skips re-copy across steps
    wkw = {} if weight_buffering is None else {"pipeline_mode": weight_buffering}

    D = E // num_heads
    flops = (2 * B * N * E * 3 * E                      # fused QKV projection
             + 4 * B * num_heads * N * N * D            # energy + att@v
             + 2 * B * N * E * E)                       # output projection
    transcendentals = B * num_heads * N * N             # exp per energy element
    bytes_accessed = (2 * B * N * E * 4                 # x in + out (f32)
                      + (E * 3 * E + E * E) * 2         # bf16 weights
                      + (3 * E + E) * 4)                # biases

    return pl.pallas_call(
        partial(mha_kernel, num_heads=num_heads),
        out_shape=jax.ShapeDtypeStruct((B, N, E), x.dtype),
        grid=grid,
        in_specs=[
            pl.BlockSpec((BB, N, E), lambda i: (i, 0, 0)),    # x: BB batch rows/step
            pl.BlockSpec((E, 3 * E), const2d, **wkw),         # fused, un-interleaved Wqkv^T (bf16)
            pl.BlockSpec((1, 3 * E), const2d, **wkw),         # fused qkv bias (f32)
            pl.BlockSpec((E, E), const2d, **wkw),             # Wproj^T (bf16)
            pl.BlockSpec((1, E), const2d, **wkw),             # bproj (f32)
        ],
        out_specs=pl.BlockSpec((BB, N, E), lambda i: (i, 0, 0)),
        scratch_shapes=[
            pltpu.VMEM((BB, N, 3 * E), jnp.bfloat16),         # fused QKV result
            pltpu.VMEM((BB, N, E), jnp.bfloat16),             # concat-head buffer
        ],
        compiler_params=pltpu.CompilerParams(
            dimension_semantics=("parallel",),
            vmem_limit_bytes=vmem_limit_bytes,
        ),
        cost_estimate=pl.CostEstimate(flops=flops,
                                      transcendentals=transcendentals,
                                      bytes_accessed=bytes_accessed),
    )(x, wqkv, bqkv, wp, bp)


def multi_head_attention(x, params, num_heads):
    B, N, E = x.shape
    H = num_heads
    D = E // H
    Wqkv, bqkv = params["Wqkv"], params["bqkv"]      # (3E, E), (3E,)
    Wproj, bproj = params["Wproj"], params["bproj"]  # (E, E), (E,)

    # PyTorch Linear weight is (out, in); the fused qkv output-feature index is
    # j = h*(D*3) + d*3 + qkv  (rearrange 'b n (h d qkv)').  Un-interleave the
    # COLUMNS of Wqkv^T to [Q(h,d) | K(h,d) | V(h,d)] so the kernel runs a single
    # fused matmul and slices q/k/v at E-sized offsets.  (h, d) column order also
    # matches 'b h n d -> b n (h d)', so Wproj^T rows line up with the head buffer.
    Wqkv_un = jnp.transpose(Wqkv.T.reshape(E, H, D, 3), (0, 3, 1, 2)).reshape(E, 3 * E)
    bqkv_un = jnp.transpose(bqkv.reshape(H, D, 3), (2, 0, 1)).reshape(1, 3 * E)

    # bf16 weights: MXU-native operands, half the HBM->VMEM DMA and VMEM footprint.
    # Biases stay f32 (added to the f32 accumulator).
    Wqkv_bf = Wqkv_un.astype(jnp.bfloat16)
    WpT_bf = Wproj.T.astype(jnp.bfloat16)
    bqkv_f = bqkv_un.astype(jnp.float32)
    bp_f = bproj.reshape(1, E).astype(jnp.float32)

    cfg = _chip_config()
    BB = _pick_batch_block(B, N, E,
                           target_rows=cfg["target_rows"],
                           vmem_budget=cfg["vmem_limit"],
                           keep_two_blocks=cfg["two_cores"])
    call = partial(_mha_call, num_heads=H, batch_block=BB,
                   vmem_limit_bytes=cfg["vmem_limit"])

    try:
        # Single-buffer the constant-index weights/biases: their block index never
        # changes, so default double-buffering only wastes VMEM.
        return call(x, Wqkv_bf, bqkv_f, WpT_bf, bp_f,
                    weight_buffering=pl.Buffered(1))
    except Exception:
        # Fallback for jax versions where pipeline_mode single-buffering is rejected.
        return call(x, Wqkv_bf, bqkv_f, WpT_bf, bp_f, weight_buffering=None)


def reference_mha(x, params, num_heads):
    """Pure-JAX f32 replica of the PyTorch forward (for verification)."""
    B, N, E = x.shape
    D = E // num_heads
    qkv = x @ params["Wqkv"].T + params["bqkv"]                 # (B, N, 3E)
    qkv = qkv.reshape(B, N, num_heads, D, 3)
    qkv = jnp.transpose(qkv, (4, 0, 2, 1, 3))                   # (3, B, H, N, D)
    q, k, v = qkv[0], qkv[1], qkv[2]
    energy = jnp.einsum('bhqd,bhkd->bhqk', q, k)
    att = jax.nn.softmax(energy, axis=-1) / (E ** 0.5)
    out = jnp.einsum('bhal,bhlv->bhav', att, v)                 # (B, H, N, D)
    out = jnp.transpose(out, (0, 2, 1, 3)).reshape(B, N, E)
    return out @ params["Wproj"].T + params["bproj"]


def init_params(key, emb_size):
    """Deterministic init mimicking nn.Linear's uniform(-1/sqrt(in), 1/sqrt(in))."""
    k1, k2, k3, k4 = jax.random.split(key, 4)
    bound = 1.0 / math.sqrt(emb_size)
    return {
        "Wqkv": jax.random.uniform(k1, (3 * emb_size, emb_size), jnp.float32, -bound, bound),
        "bqkv": jax.random.uniform(k2, (3 * emb_size,), jnp.float32, -bound, bound),
        "Wproj": jax.random.uniform(k3, (emb_size, emb_size), jnp.float32, -bound, bound),
        "bproj": jax.random.uniform(k4, (emb_size,), jnp.float32, -bound, bound),
    }


if __name__ == "__main__":
    B, N, E, H = 2, 8, 32, 4   # batch, seq, emb_size, num_heads (head_dim = 8)

    key = jax.random.PRNGKey(0)
    kx, kp = jax.random.split(key)
    x = jax.random.normal(kx, (B, N, E), dtype=jnp.float32)
    params = init_params(kp, E)

    out = multi_head_attention(x, params, num_heads=H)
    out = jax.block_until_ready(out)

    ref = reference_mha(x, params, num_heads=H)
    assert out.shape == (B, N, E)
    # bf16 MXU operands (f32 accumulation) -> looser-than-f32 tolerance.
    assert jnp.allclose(out, ref, atol=2e-2, rtol=2e-2), "mismatch vs reference"

    print("KERNEL_OK")
</pallas_src>

<mosaic_0001>
module attributes {stable_mosaic.version = 11 : i64} {
  func.func @mha_kernel(%arg0: i32, %arg1: memref<1x8x32xf32, #tpu.memory_space<vmem>>, %arg2: memref<32x96xbf16, #tpu.memory_space<vmem>>, %arg3: memref<1x96xf32, #tpu.memory_space<vmem>>, %arg4: memref<32x32xbf16, #tpu.memory_space<vmem>>, %arg5: memref<1x32xf32, #tpu.memory_space<vmem>>, %arg6: memref<1x8x32xf32, #tpu.memory_space<vmem>>, %arg7: memref<1x8x96xbf16, #tpu.memory_space<vmem>>, %arg8: memref<1x8x32xbf16, #tpu.memory_space<vmem>>) attributes {dimension_semantics = [#tpu.dimension_semantics<parallel>], iteration_bounds = array<i64: 2>, scalar_prefetch = 0 : i64, scratch_operands = 2 : i64, tpu.core_type = #tpu.core_type<tc>, window_params = [{transform_indices = @transform_0, window_bounds = array<i64: 1, 8, 32>}, {pipeline_mode = #tpu.pipeline_mode<synchronous>, transform_indices = @transform_1, window_bounds = array<i64: 32, 96>}, {pipeline_mode = #tpu.pipeline_mode<synchronous>, transform_indices = @transform_2, window_bounds = array<i64: 1, 96>}, {pipeline_mode = #tpu.pipeline_mode<synchronous>, transform_indices = @transform_3, window_bounds = array<i64: 32, 32>}, {pipeline_mode = #tpu.pipeline_mode<synchronous>, transform_indices = @transform_4, window_bounds = array<i64: 1, 32>}, {transform_indices = @transform_5, window_bounds = array<i64: 1, 8, 32>}]} {
    %c0 = arith.constant 0 : index
    %c0_0 = arith.constant 0 : index
    %c0_1 = arith.constant 0 : index
    %0 = vector.load %arg1[%c0, %c0_0, %c0_1] : memref<1x8x32xf32, #tpu.memory_space<vmem>>, vector<1x8x32xf32>
    %1 = vector.shape_cast %0 : vector<1x8x32xf32> to vector<8x32xf32>
    %2 = arith.truncf %1 : vector<8x32xf32> to vector<8x32xbf16>
    %c0_2 = arith.constant 0 : index
    %c0_3 = arith.constant 0 : index
    %3 = vector.load %arg2[%c0_2, %c0_3] : memref<32x96xbf16, #tpu.memory_space<vmem>>, vector<32x96xbf16>
    %cst = arith.constant dense<0.000000e+00> : vector<8x96xf32>
    %4 = tpu.matmul %2, %3, %cst {dimension_numbers = #tpu.dot_dimension_numbers<[1], [0], [0], [1], [0, 0, 1, 1], [], []>} : vector<8x32xbf16>, vector<32x96xbf16>, vector<8x96xf32> -> vector<8x96xf32>
    %c0_4 = arith.constant 0 : index
    %c0_5 = arith.constant 0 : index
    %5 = vector.load %arg3[%c0_4, %c0_5] : memref<1x96xf32, #tpu.memory_space<vmem>>, vector<1x96xf32>
    %6 = vector.broadcast %5 : vector<1x96xf32> to vector<8x96xf32>
    %7 = arith.addf %4, %6 : vector<8x96xf32>
    %8 = vector.shape_cast %7 : vector<8x96xf32> to vector<1x8x96xf32>
    %9 = arith.truncf %8 : vector<1x8x96xf32> to vector<1x8x96xbf16>
    %c0_6 = arith.constant 0 : index
    %c0_7 = arith.constant 0 : index
    %c0_8 = arith.constant 0 : index
    %10 = vector.load %arg7[%c0_6, %c0_7, %c0_8] : memref<1x8x96xbf16, #tpu.memory_space<vmem>>, vector<1x8x96xbf16>
    tpu.vector_store %arg7[%c0_6, %c0_7, %c0_8], %9 {strides = array<i32>} : memref<1x8x96xbf16, #tpu.memory_space<vmem>>, vector<1x8x96xbf16>,
    %cst_9 = arith.constant 5.65685415 : f32
    %c0_i32 = arith.constant 0 : i32
    %c1_i32 = arith.constant 1 : i32
    %11 = arith.muli %c0_i32, %c1_i32 : i32
    %c0_i32_10 = arith.constant 0 : i32
    %12 = arith.addi %c0_i32_10, %11 : i32
    %13 = arith.index_cast %12 : i32 to index
    %c0_11 = arith.constant 0 : index
    %c0_12 = arith.constant 0 : index
    %14 = vector.load %arg7[%13, %c0_11, %c0_12] : memref<1x8x96xbf16, #tpu.memory_space<vmem>>, vector<1x8x8xbf16>
    %15 = vector.shape_cast %14 : vector<1x8x8xbf16> to vector<8x8xbf16>
    %16 = arith.index_cast %12 : i32 to index
    %c0_13 = arith.constant 0 : index
    %c32 = arith.constant 32 : index
    %17 = vector.load %arg7[%16, %c0_13, %c32] : memref<1x8x96xbf16, #tpu.memory_space<vmem>>, vector<1x8x8xbf16>
    %18 = vector.shape_cast %17 : vector<1x8x8xbf16> to vector<8x8xbf16>
    %19 = arith.index_cast %12 : i32 to index
    %c0_14 = arith.constant 0 : index
    %c64 = arith.constant 64 : index
    %20 = vector.load %arg7[%19, %c0_14, %c64] : memref<1x8x96xbf16, #tpu.memory_space<vmem>>, vector<1x8x8xbf16>
    %21 = vector.shape_cast %20 : vector<1x8x8xbf16> to vector<8x8xbf16>
    %cst_15 = arith.constant dense<0.000000e+00> : vector<8x8xf32>
    %22 = tpu.matmul %15, %18, %cst_15 {dimension_numbers = #tpu.dot_dimension_numbers<[1], [1], [0], [0], [0, 0, 1, 0], [], []>} : vector<8x8xbf16>, vector<8x8xbf16>, vector<8x8xf32> -> vector<8x8xf32>
    %cst_16 = arith.constant dense<0xFF800000> : vector<8xf32>
    %23 = vector.multi_reduction <maximumf>, %22, %cst_16 [1] : vector<8x8xf32> to vector<8xf32>
    %24 = vector.shape_cast %23 : vector<8xf32> to vector<8x1xf32>
    %25 = vector.broadcast %24 : vector<8x1xf32> to vector<8x8xf32>
    %26 = arith.subf %22, %25 : vector<8x8xf32>
    %27 = math.exp %26 : vector<8x8xf32>
    %cst_17 = arith.constant dense<0.000000e+00> : vector<8xf32>
    %28 = vector.multi_reduction <add>, %27, %cst_17 [1] : vector<8x8xf32> to vector<8xf32>
    %29 = vector.shape_cast %28 : vector<8xf32> to vector<8x1xf32>
    %30 = vector.broadcast %cst_9 : f32 to vector<8x1xf32>
    %31 = arith.mulf %29, %30 : vector<8x1xf32>
    %32 = tpu.reciprocal %31 : vector<8x1xf32> -> vector<8x1xf32>
    %33 = vector.broadcast %32 : vector<8x1xf32> to vector<8x8xf32>
    %34 = arith.mulf %27, %33 : vector<8x8xf32>
    %35 = arith.truncf %34 : vector<8x8xf32> to vector<8x8xbf16>
    %cst_18 = arith.constant dense<0.000000e+00> : vector<8x8xf32>
    %36 = tpu.matmul %35, %21, %cst_18 {dimension_numbers = #tpu.dot_dimension_numbers<[1], [0], [0], [1], [0, 0, 1, 1], [], []>} : vector<8x8xbf16>, vector<8x8xbf16>, vector<8x8xf32> -> vector<8x8xf32>
    %37 = arith.index_cast %12 : i32 to index
    %c0_19 = arith.constant 0 : index
    %c8 = arith.constant 8 : index
    %38 = vector.load %arg7[%37, %c0_19, %c8] : memref<1x8x96xbf16, #tpu.memory_space<vmem>>, vector<1x8x8xbf16>
    %39 = vector.shape_cast %38 : vector<1x8x8xbf16> to vector<8x8xbf16>
    %40 = arith.index_cast %12 : i32 to index
    %c0_20 = arith.constant 0 : index
    %c40 = arith.constant 40 : index
    %41 = vector.load %arg7[%40, %c0_20, %c40] : memref<1x8x96xbf16, #tpu.memory_space<vmem>>, vector<1x8x8xbf16>
    %42 = vector.shape_cast %41 : vector<1x8x8xbf16> to vector<8x8xbf16>
    %43 = arith.index_cast %12 : i32 to index
    %c0_21 = arith.constant 0 : index
    %c72 = arith.constant 72 : index
    %44 = vector.load %arg7[%43, %c0_21, %c72] : memref<1x8x96xbf16, #tpu.memory_space<vmem>>, vector<1x8x8xbf16>
    %45 = vector.shape_cast %44 : vector<1x8x8xbf16> to vector<8x8xbf16>
    %cst_22 = arith.constant dense<0.000000e+00> : vector<8x8xf32>
    %46 = tpu.matmul %39, %42, %cst_22 {dimension_numbers = #tpu.dot_dimension_numbers<[1], [1], [0], [0], [0, 0, 1, 0], [], []>} : vector<8x8xbf16>, vector<8x8xbf16>, vector<8x8xf32> -> vector<8x8xf32>
    %cst_23 = arith.constant dense<0xFF800000> : vector<8xf32>
    %47 = vector.multi_reduction <maximumf>, %46, %cst_23 [1] : vector<8x8xf32> to vector<8xf32>
    %48 = vector.shape_cast %47 : vector<8xf32> to vector<8x1xf32>
    %49 = vector.broadcast %48 : vector<8x1xf32> to vector<8x8xf32>
    %50 = arith.subf %46, %49 : vector<8x8xf32>
    %51 = math.exp %50 : vector<8x8xf32>
    %cst_24 = arith.constant dense<0.000000e+00> : vector<8xf32>
    %52 = vector.multi_reduction <add>, %51, %cst_24 [1] : vector<8x8xf32> to vector<8xf32>
    %53 = vector.shape_cast %52 : vector<8xf32> to vector<8x1xf32>
    %54 = vector.broadcast %cst_9 : f32 to vector<8x1xf32>
    %55 = arith.mulf %53, %54 : vector<8x1xf32>
    %56 = tpu.reciprocal %55 : vector<8x1xf32> -> vector<8x1xf32>
    %57 = vector.broadcast %56 : vector<8x1xf32> to vector<8x8xf32>
    %58 = arith.mulf %51, %57 : vector<8x8xf32>
    %59 = arith.truncf %58 : vector<8x8xf32> to vector<8x8xbf16>
    %cst_25 = arith.constant dense<0.000000e+00> : vector<8x8xf32>
    %60 = tpu.matmul %59, %45, %cst_25 {dimension_numbers = #tpu.dot_dimension_numbers<[1], [0], [0], [1], [0, 0, 1, 1], [], []>} : vector<8x8xbf16>, vector<8x8xbf16>, vector<8x8xf32> -> vector<8x8xf32>
    %61 = arith.index_cast %12 : i32 to index
    %c0_26 = arith.constant 0 : index
    %c16 = arith.constant 16 : index
    %62 = vector.load %arg7[%61, %c0_26, %c16] : memref<1x8x96xbf16, #tpu.memory_space<vmem>>, vector<1x8x8xbf16>
    %63 = vector.shape_cast %62 : vector<1x8x8xbf16> to vector<8x8xbf16>
    %64 = arith.index_cast %12 : i32 to index
    %c0_27 = arith.constant 0 : index
    %c48 = arith.constant 48 : index
    %65 = vector.load %arg7[%64, %c0_27, %c48] : memref<1x8x96xbf16, #tpu.memory_space<vmem>>, vector<1x8x8xbf16>
    %66 = vector.shape_cast %65 : vector<1x8x8xbf16> to vector<8x8xbf16>
    %67 = arith.index_cast %12 : i32 to index
    %c0_28 = arith.constant 0 : index
    %c80 = arith.constant 80 : index
    %68 = vector.load %arg7[%67, %c0_28, %c80] : memref<1x8x96xbf16, #tpu.memory_space<vmem>>, vector<1x8x8xbf16>
    %69 = vector.shape_cast %68 : vector<1x8x8xbf16> to vector<8x8xbf16>
    %cst_29 = arith.constant dense<0.000000e+00> : vector<8x8xf32>
    %70 = tpu.matmul %63, %66, %cst_29 {dimension_numbers = #tpu.dot_dimension_numbers<[1], [1], [0], [0], [0, 0, 1, 0], [], []>} : vector<8x8xbf16>, vector<8x8xbf16>, vector<8x8xf32> -> vector<8x8xf32>
    %cst_30 = arith.constant dense<0xFF800000> : vector<8xf32>
    %71 = vector.multi_reduction <maximumf>, %70, %cst_30 [1] : vector<8x8xf32> to vector<8xf32>
    %72 = vector.shape_cast %71 : vector<8xf32> to vector<8x1xf32>
    %73 = vector.broadcast %72 : vector<8x1xf32> to vector<8x8xf32>
    %74 = arith.subf %70, %73 : vector<8x8xf32>
    %75 = math.exp %74 : vector<8x8xf32>
    %cst_31 = arith.constant dense<0.000000e+00> : vector<8xf32>
    %76 = vector.multi_reduction <add>, %75, %cst_31 [1] : vector<8x8xf32> to vector<8xf32>
    %77 = vector.shape_cast %76 : vector<8xf32> to vector<8x1xf32>
    %78 = vector.broadcast %cst_9 : f32 to vector<8x1xf32>
    %79 = arith.mulf %77, %78 : vector<8x1xf32>
    %80 = tpu.reciprocal %79 : vector<8x1xf32> -> vector<8x1xf32>
    %81 = vector.broadcast %80 : vector<8x1xf32> to vector<8x8xf32>
    %82 = arith.mulf %75, %81 : vector<8x8xf32>
    %83 = arith.truncf %82 : vector<8x8xf32> to vector<8x8xbf16>
    %cst_32 = arith.constant dense<0.000000e+00> : vector<8x8xf32>
    %84 = tpu.matmul %83, %69, %cst_32 {dimension_numbers = #tpu.dot_dimension_numbers<[1], [0], [0], [1], [0, 0, 1, 1], [], []>} : vector<8x8xbf16>, vector<8x8xbf16>, vector<8x8xf32> -> vector<8x8xf32>
    %85 = arith.index_cast %12 : i32 to index
    %c0_33 = arith.constant 0 : index
    %c24 = arith.constant 24 : index
    %86 = vector.load %arg7[%85, %c0_33, %c24] : memref<1x8x96xbf16, #tpu.memory_space<vmem>>, vector<1x8x8xbf16>
    %87 = vector.shape_cast %86 : vector<1x8x8xbf16> to vector<8x8xbf16>
    %88 = arith.index_cast %12 : i32 to index
    %c0_34 = arith.constant 0 : index
    %c56 = arith.constant 56 : index
    %89 = vector.load %arg7[%88, %c0_34, %c56] : memref<1x8x96xbf16, #tpu.memory_space<vmem>>, vector<1x8x8xbf16>
    %90 = vector.shape_cast %89 : vector<1x8x8xbf16> to vector<8x8xbf16>
    %91 = arith.index_cast %12 : i32 to index
    %c0_35 = arith.constant 0 : index
    %c88 = arith.constant 88 : index
    %92 = vector.load %arg7[%91, %c0_35, %c88] : memref<1x8x96xbf16, #tpu.memory_space<vmem>>, vector<1x8x8xbf16>
    %93 = vector.shape_cast %92 : vector<1x8x8xbf16> to vector<8x8xbf16>
    %cst_36 = arith.constant dense<0.000000e+00> : vector<8x8xf32>
    %94 = tpu.matmul %87, %90, %cst_36 {dimension_numbers = #tpu.dot_dimension_numbers<[1], [1], [0], [0], [0, 0, 1, 0], [], []>} : vector<8x8xbf16>, vector<8x8xbf16>, vector<8x8xf32> -> vector<8x8xf32>
    %cst_37 = arith.constant dense<0xFF800000> : vector<8xf32>
    %95 = vector.multi_reduction <maximumf>, %94, %cst_37 [1] : vector<8x8xf32> to vector<8xf32>
    %96 = vector.shape_cast %95 : vector<8xf32> to vector<8x1xf32>
    %97 = vector.broadcast %96 : vector<8x1xf32> to vector<8x8xf32>
    %98 = arith.subf %94, %97 : vector<8x8xf32>
    %99 = math.exp %98 : vector<8x8xf32>
    %cst_38 = arith.constant dense<0.000000e+00> : vector<8xf32>
    %100 = vector.multi_reduction <add>, %99, %cst_38 [1] : vector<8x8xf32> to vector<8xf32>
    %101 = vector.shape_cast %100 : vector<8xf32> to vector<8x1xf32>
    %102 = vector.broadcast %cst_9 : f32 to vector<8x1xf32>
    %103 = arith.mulf %101, %102 : vector<8x1xf32>
    %104 = tpu.reciprocal %103 : vector<8x1xf32> -> vector<8x1xf32>
    %105 = vector.broadcast %104 : vector<8x1xf32> to vector<8x8xf32>
    %106 = arith.mulf %99, %105 : vector<8x8xf32>
    %107 = arith.truncf %106 : vector<8x8xf32> to vector<8x8xbf16>
    %cst_39 = arith.constant dense<0.000000e+00> : vector<8x8xf32>
    %108 = tpu.matmul %107, %93, %cst_39 {dimension_numbers = #tpu.dot_dimension_numbers<[1], [0], [0], [1], [0, 0, 1, 1], [], []>} : vector<8x8xbf16>, vector<8x8xbf16>, vector<8x8xf32> -> vector<8x8xf32>
    %109 = tpu.concatenate %36, %60, %84, %108 in 1 : vector<8x8xf32>, vector<8x8xf32>, vector<8x8xf32>, vector<8x8xf32> -> vector<8x32xf32>
    %110 = arith.truncf %109 : vector<8x32xf32> to vector<8x32xbf16>
    %111 = arith.index_cast %12 : i32 to index
    %c0_40 = arith.constant 0 : index
    %c0_41 = arith.constant 0 : index
    %112 = vector.load %arg8[%111, %c0_40, %c0_41] : memref<1x8x32xbf16, #tpu.memory_space<vmem>>, vector<1x8x32xbf16>
    %113 = vector.shape_cast %112 : vector<1x8x32xbf16> to vector<8x32xbf16>
    %114 = vector.shape_cast %110 : vector<8x32xbf16> to vector<1x8x32xbf16>
    tpu.vector_store %arg8[%111, %c0_40, %c0_41], %114 {strides = array<i32>} : memref<1x8x32xbf16, #tpu.memory_space<vmem>>, vector<1x8x32xbf16>,
    %c1_i32_42 = arith.constant 1 : i32
    %c0_43 = arith.constant 0 : index
    %c0_44 = arith.constant 0 : index
    %c0_45 = arith.constant 0 : index
    %115 = vector.load %arg8[%c0_43, %c0_44, %c0_45] : memref<1x8x32xbf16, #tpu.memory_space<vmem>>, vector<1x8x32xbf16>
    %116 = vector.shape_cast %115 : vector<1x8x32xbf16> to vector<8x32xbf16>
    %c0_46 = arith.constant 0 : index
    %c0_47 = arith.constant 0 : index
    %117 = vector.load %arg4[%c0_46, %c0_47] : memref<32x32xbf16, #tpu.memory_space<vmem>>, vector<32x32xbf16>
    %cst_48 = arith.constant dense<0.000000e+00> : vector<8x32xf32>
    %118 = tpu.matmul %116, %117, %cst_48 {dimension_numbers = #tpu.dot_dimension_numbers<[1], [0], [0], [1], [0, 0, 1, 1], [], []>} : vector<8x32xbf16>, vector<32x32xbf16>, vector<8x32xf32> -> vector<8x32xf32>
    %c0_49 = arith.constant 0 : index
    %c0_50 = arith.constant 0 : index
    %119 = vector.load %arg5[%c0_49, %c0_50] : memref<1x32xf32, #tpu.memory_space<vmem>>, vector<1x32xf32>
    %120 = vector.broadcast %119 : vector<1x32xf32> to vector<8x32xf32>
    %121 = arith.addf %118, %120 : vector<8x32xf32>
    %122 = vector.shape_cast %121 : vector<8x32xf32> to vector<1x8x32xf32>
    %c0_51 = arith.constant 0 : index
    %c0_52 = arith.constant 0 : index
    %c0_53 = arith.constant 0 : index
    %123 = vector.load %arg6[%c0_51, %c0_52, %c0_53] : memref<1x8x32xf32, #tpu.memory_space<vmem>>, vector<1x8x32xf32>
    tpu.vector_store %arg6[%c0_51, %c0_52, %c0_53], %122 {strides = array<i32>} : memref<1x8x32xf32, #tpu.memory_space<vmem>>, vector<1x8x32xf32>,
    return
  }
  func.func @transform_0(%arg0: i32) -> (i32, i32, i32) {
    %c0_i32 = arith.constant 0 : i32
    %c0_i32_0 = arith.constant 0 : i32
    %c0_i32_1 = arith.constant 0 : i32
    return %arg0, %c0_i32, %c0_i32_0 : i32, i32, i32
  }
  func.func @transform_1(%arg0: i32) -> (i32, i32) {
    %c0_i32 = arith.constant 0 : i32
    %c0_i32_0 = arith.constant 0 : i32
    %c0_i32_1 = arith.constant 0 : i32
    return %c0_i32, %c0_i32_0 : i32, i32
  }
  func.func @transform_2(%arg0: i32) -> (i32, i32) {
    %c0_i32 = arith.constant 0 : i32
    %c0_i32_0 = arith.constant 0 : i32
    %c0_i32_1 = arith.constant 0 : i32
    return %c0_i32, %c0_i32_0 : i32, i32
  }
  func.func @transform_3(%arg0: i32) -> (i32, i32) {
    %c0_i32 = arith.constant 0 : i32
    %c0_i32_0 = arith.constant 0 : i32
    %c0_i32_1 = arith.constant 0 : i32
    return %c0_i32, %c0_i32_0 : i32, i32
  }
  func.func @transform_4(%arg0: i32) -> (i32, i32) {
    %c0_i32 = arith.constant 0 : i32
    %c0_i32_0 = arith.constant 0 : i32
    %c0_i32_1 = arith.constant 0 : i32
    return %c0_i32, %c0_i32_0 : i32, i32
  }
  func.func @transform_5(%arg0: i32) -> (i32, i32, i32) {
    %c0_i32 = arith.constant 0 : i32
    %c0_i32_0 = arith.constant 0 : i32
    %c0_i32_1 = arith.constant 0 : i32
    return %arg0, %c0_i32, %c0_i32_0 : i32, i32, i32
  }
}

module attributes {stable_mosaic.version = 11 : i64} {
  func.func @mha_kernel(%arg0: i32, %arg1: memref<1x8x32xf32, #tpu.memory_space<vmem>>, %arg2: memref<32x96xbf16, #tpu.memory_space<vmem>>, %arg3: memref<1x96xf32, #tpu.memory_space<vmem>>, %arg4: memref<32x32xbf16, #tpu.memory_space<vmem>>, %arg5: memref<1x32xf32, #tpu.memory_space<vmem>>, %arg6: memref<1x8x32xf32, #tpu.memory_space<vmem>>, %arg7: memref<1x8x96xbf16, #tpu.memory_space<vmem>>, %arg8: memref<1x8x32xbf16, #tpu.memory_space<vmem>>) attributes {dimension_semantics = [#tpu.dimension_semantics<parallel>], iteration_bounds = array<i64: 2>, scalar_prefetch = 0 : i64, scratch_operands = 2 : i64, tpu.core_type = #tpu.core_type<tc>, window_params = [{transform_indices = @transform_0, window_bounds = array<i64: 1, 8, 32>}, {pipeline_mode = #tpu.pipeline_mode<synchronous>, transform_indices = @transform_1, window_bounds = array<i64: 32, 96>}, {pipeline_mode = #tpu.pipeline_mode<synchronous>, transform_indices = @transform_2, window_bounds = array<i64: 1, 96>}, {pipeline_mode = #tpu.pipeline_mode<synchronous>, transform_indices = @transform_3, window_bounds = array<i64: 32, 32>}, {pipeline_mode = #tpu.pipeline_mode<synchronous>, transform_indices = @transform_4, window_bounds = array<i64: 1, 32>}, {transform_indices = @transform_5, window_bounds = array<i64: 1, 8, 32>}]} {
    %c0 = arith.constant 0 : index
    %c0_0 = arith.constant 0 : index
    %c0_1 = arith.constant 0 : index
    %0 = vector.load %arg1[%c0, %c0_0, %c0_1] : memref<1x8x32xf32, #tpu.memory_space<vmem>>, vector<1x8x32xf32>
    %1 = vector.shape_cast %0 : vector<1x8x32xf32> to vector<8x32xf32>
    %2 = arith.truncf %1 : vector<8x32xf32> to vector<8x32xbf16>
    %c0_2 = arith.constant 0 : index
    %c0_3 = arith.constant 0 : index
    %3 = vector.load %arg2[%c0_2, %c0_3] : memref<32x96xbf16, #tpu.memory_space<vmem>>, vector<32x96xbf16>
    %cst = arith.constant dense<0.000000e+00> : vector<8x96xf32>
    %4 = tpu.matmul %2, %3, %cst {dimension_numbers = #tpu.dot_dimension_numbers<[1], [0], [0], [1], [0, 0, 1, 1], [], []>} : vector<8x32xbf16>, vector<32x96xbf16>, vector<8x96xf32> -> vector<8x96xf32>
    %c0_4 = arith.constant 0 : index
    %c0_5 = arith.constant 0 : index
    %5 = vector.load %arg3[%c0_4, %c0_5] : memref<1x96xf32, #tpu.memory_space<vmem>>, vector<1x96xf32>
    %6 = vector.broadcast %5 : vector<1x96xf32> to vector<8x96xf32>
    %7 = arith.addf %4, %6 : vector<8x96xf32>
    %8 = vector.shape_cast %7 : vector<8x96xf32> to vector<1x8x96xf32>
    %9 = arith.truncf %8 : vector<1x8x96xf32> to vector<1x8x96xbf16>
    %c0_6 = arith.constant 0 : index
    %c0_7 = arith.constant 0 : index
    %c0_8 = arith.constant 0 : index
    %10 = vector.load %arg7[%c0_6, %c0_7, %c0_8] : memref<1x8x96xbf16, #tpu.memory_space<vmem>>, vector<1x8x96xbf16>
    tpu.vector_store %arg7[%c0_6, %c0_7, %c0_8], %9 {strides = array<i32>} : memref<1x8x96xbf16, #tpu.memory_space<vmem>>, vector<1x8x96xbf16>,
    %cst_9 = arith.constant 5.65685415 : f32
    %c0_i32 = arith.constant 0 : i32
    %c1_i32 = arith.constant 1 : i32
    %11 = arith.muli %c0_i32, %c1_i32 : i32
    %c0_i32_10 = arith.constant 0 : i32
    %12 = arith.addi %c0_i32_10, %11 : i32
    %13 = arith.index_cast %12 : i32 to index
    %c0_11 = arith.constant 0 : index
    %c0_12 = arith.constant 0 : index
    %14 = vector.load %arg7[%13, %c0_11, %c0_12] : memref<1x8x96xbf16, #tpu.memory_space<vmem>>, vector<1x8x8xbf16>
    %15 = vector.shape_cast %14 : vector<1x8x8xbf16> to vector<8x8xbf16>
    %16 = arith.index_cast %12 : i32 to index
    %c0_13 = arith.constant 0 : index
    %c32 = arith.constant 32 : index
    %17 = vector.load %arg7[%16, %c0_13, %c32] : memref<1x8x96xbf16, #tpu.memory_space<vmem>>, vector<1x8x8xbf16>
    %18 = vector.shape_cast %17 : vector<1x8x8xbf16> to vector<8x8xbf16>
    %19 = arith.index_cast %12 : i32 to index
    %c0_14 = arith.constant 0 : index
    %c64 = arith.constant 64 : index
    %20 = vector.load %arg7[%19, %c0_14, %c64] : memref<1x8x96xbf16, #tpu.memory_space<vmem>>, vector<1x8x8xbf16>
    %21 = vector.shape_cast %20 : vector<1x8x8xbf16> to vector<8x8xbf16>
    %cst_15 = arith.constant dense<0.000000e+00> : vector<8x8xf32>
    %22 = tpu.matmul %15, %18, %cst_15 {dimension_numbers = #tpu.dot_dimension_numbers<[1], [1], [0], [0], [0, 0, 1, 0], [], []>} : vector<8x8xbf16>, vector<8x8xbf16>, vector<8x8xf32> -> vector<8x8xf32>
    %cst_16 = arith.constant dense<0xFF800000> : vector<8xf32>
    %23 = vector.multi_reduction <maximumf>, %22, %cst_16 [1] : vector<8x8xf32> to vector<8xf32>
    %24 = vector.shape_cast %23 : vector<8xf32> to vector<8x1xf32>
    %25 = vector.broadcast %24 : vector<8x1xf32> to vector<8x8xf32>
    %26 = arith.subf %22, %25 : vector<8x8xf32>
    %27 = math.exp %26 : vector<8x8xf32>
    %cst_17 = arith.constant dense<0.000000e+00> : vector<8xf32>
    %28 = vector.multi_reduction <add>, %27, %cst_17 [1] : vector<8x8xf32> to vector<8xf32>
    %29 = vector.shape_cast %28 : vector<8xf32> to vector<8x1xf32>
    %30 = vector.broadcast %cst_9 : f32 to vector<8x1xf32>
    %31 = arith.mulf %29, %30 : vector<8x1xf32>
    %32 = tpu.reciprocal %31 : vector<8x1xf32> -> vector<8x1xf32>
    %33 = vector.broadcast %32 : vector<8x1xf32> to vector<8x8xf32>
    %34 = arith.mulf %27, %33 : vector<8x8xf32>
    %35 = arith.truncf %34 : vector<8x8xf32> to vector<8x8xbf16>
    %cst_18 = arith.constant dense<0.000000e+00> : vector<8x8xf32>
    %36 = tpu.matmul %35, %21, %cst_18 {dimension_numbers = #tpu.dot_dimension_numbers<[1], [0], [0], [1], [0, 0, 1, 1], [], []>} : vector<8x8xbf16>, vector<8x8xbf16>, vector<8x8xf32> -> vector<8x8xf32>
    %37 = arith.index_cast %12 : i32 to index
    %c0_19 = arith.constant 0 : index
    %c8 = arith.constant 8 : index
    %38 = vector.load %arg7[%37, %c0_19, %c8] : memref<1x8x96xbf16, #tpu.memory_space<vmem>>, vector<1x8x8xbf16>
    %39 = vector.shape_cast %38 : vector<1x8x8xbf16> to vector<8x8xbf16>
    %40 = arith.index_cast %12 : i32 to index
    %c0_20 = arith.constant 0 : index
    %c40 = arith.constant 40 : index
    %41 = vector.load %arg7[%40, %c0_20, %c40] : memref<1x8x96xbf16, #tpu.memory_space<vmem>>, vector<1x8x8xbf16>
    %42 = vector.shape_cast %41 : vector<1x8x8xbf16> to vector<8x8xbf16>
    %43 = arith.index_cast %12 : i32 to index
    %c0_21 = arith.constant 0 : index
    %c72 = arith.constant 72 : index
    %44 = vector.load %arg7[%43, %c0_21, %c72] : memref<1x8x96xbf16, #tpu.memory_space<vmem>>, vector<1x8x8xbf16>
    %45 = vector.shape_cast %44 : vector<1x8x8xbf16> to vector<8x8xbf16>
    %cst_22 = arith.constant dense<0.000000e+00> : vector<8x8xf32>
    %46 = tpu.matmul %39, %42, %cst_22 {dimension_numbers = #tpu.dot_dimension_numbers<[1], [1], [0], [0], [0, 0, 1, 0], [], []>} : vector<8x8xbf16>, vector<8x8xbf16>, vector<8x8xf32> -> vector<8x8xf32>
    %cst_23 = arith.constant dense<0xFF800000> : vector<8xf32>
    %47 = vector.multi_reduction <maximumf>, %46, %cst_23 [1] : vector<8x8xf32> to vector<8xf32>
    %48 = vector.shape_cast %47 : vector<8xf32> to vector<8x1xf32>
    %49 = vector.broadcast %48 : vector<8x1xf32> to vector<8x8xf32>
    %50 = arith.subf %46, %49 : vector<8x8xf32>
    %51 = math.exp %50 : vector<8x8xf32>
    %cst_24 = arith.constant dense<0.000000e+00> : vector<8xf32>
    %52 = vector.multi_reduction <add>, %51, %cst_24 [1] : vector<8x8xf32> to vector<8xf32>
    %53 = vector.shape_cast %52 : vector<8xf32> to vector<8x1xf32>
    %54 = vector.broadcast %cst_9 : f32 to vector<8x1xf32>
    %55 = arith.mulf %53, %54 : vector<8x1xf32>
    %56 = tpu.reciprocal %55 : vector<8x1xf32> -> vector<8x1xf32>
    %57 = vector.broadcast %56 : vector<8x1xf32> to vector<8x8xf32>
    %58 = arith.mulf %51, %57 : vector<8x8xf32>
    %59 = arith.truncf %58 : vector<8x8xf32> to vector<8x8xbf16>
    %cst_25 = arith.constant dense<0.000000e+00> : vector<8x8xf32>
    %60 = tpu.matmul %59, %45, %cst_25 {dimension_numbers = #tpu.dot_dimension_numbers<[1], [0], [0], [1], [0, 0, 1, 1], [], []>} : vector<8x8xbf16>, vector<8x8xbf16>, vector<8x8xf32> -> vector<8x8xf32>
    %61 = arith.index_cast %12 : i32 to index
    %c0_26 = arith.constant 0 : index
    %c16 = arith.constant 16 : index
    %62 = vector.load %arg7[%61, %c0_26, %c16] : memref<1x8x96xbf16, #tpu.memory_space<vmem>>, vector<1x8x8xbf16>
    %63 = vector.shape_cast %62 : vector<1x8x8xbf16> to vector<8x8xbf16>
    %64 = arith.index_cast %12 : i32 to index
    %c0_27 = arith.constant 0 : index
    %c48 = arith.constant 48 : index
    %65 = vector.load %arg7[%64, %c0_27, %c48] : memref<1x8x96xbf16, #tpu.memory_space<vmem>>, vector<1x8x8xbf16>
    %66 = vector.shape_cast %65 : vector<1x8x8xbf16> to vector<8x8xbf16>
    %67 = arith.index_cast %12 : i32 to index
    %c0_28 = arith.constant 0 : index
    %c80 = arith.constant 80 : index
    %68 = vector.load %arg7[%67, %c0_28, %c80] : memref<1x8x96xbf16, #tpu.memory_space<vmem>>, vector<1x8x8xbf16>
    %69 = vector.shape_cast %68 : vector<1x8x8xbf16> to vector<8x8xbf16>
    %cst_29 = arith.constant dense<0.000000e+00> : vector<8x8xf32>
    %70 = tpu.matmul %63, %66, %cst_29 {dimension_numbers = #tpu.dot_dimension_numbers<[1], [1], [0], [0], [0, 0, 1, 0], [], []>} : vector<8x8xbf16>, vector<8x8xbf16>, vector<8x8xf32> -> vector<8x8xf32>
    %cst_30 = arith.constant dense<0xFF800000> : vector<8xf32>
    %71 = vector.multi_reduction <maximumf>, %70, %cst_30 [1] : vector<8x8xf32> to vector<8xf32>
    %72 = vector.shape_cast %71 : vector<8xf32> to vector<8x1xf32>
    %73 = vector.broadcast %72 : vector<8x1xf32> to vector<8x8xf32>
    %74 = arith.subf %70, %73 : vector<8x8xf32>
    %75 = math.exp %74 : vector<8x8xf32>
    %cst_31 = arith.constant dense<0.000000e+00> : vector<8xf32>
    %76 = vector.multi_reduction <add>, %75, %cst_31 [1] : vector<8x8xf32> to vector<8xf32>
    %77 = vector.shape_cast %76 : vector<8xf32> to vector<8x1xf32>
    %78 = vector.broadcast %cst_9 : f32 to vector<8x1xf32>
    %79 = arith.mulf %77, %78 : vector<8x1xf32>
    %80 = tpu.reciprocal %79 : vector<8x1xf32> -> vector<8x1xf32>
    %81 = vector.broadcast %80 : vector<8x1xf32> to vector<8x8xf32>
    %82 = arith.mulf %75, %81 : vector<8x8xf32>
    %83 = arith.truncf %82 : vector<8x8xf32> to vector<8x8xbf16>
    %cst_32 = arith.constant dense<0.000000e+00> : vector<8x8xf32>
    %84 = tpu.matmul %83, %69, %cst_32 {dimension_numbers = #tpu.dot_dimension_numbers<[1], [0], [0], [1], [0, 0, 1, 1], [], []>} : vector<8x8xbf16>, vector<8x8xbf16>, vector<8x8xf32> -> vector<8x8xf32>
    %85 = arith.index_cast %12 : i32 to index
    %c0_33 = arith.constant 0 : index
    %c24 = arith.constant 24 : index
    %86 = vector.load %arg7[%85, %c0_33, %c24] : memref<1x8x96xbf16, #tpu.memory_space<vmem>>, vector<1x8x8xbf16>
    %87 = vector.shape_cast %86 : vector<1x8x8xbf16> to vector<8x8xbf16>
    %88 = arith.index_cast %12 : i32 to index
    %c0_34 = arith.constant 0 : index
    %c56 = arith.constant 56 : index
    %89 = vector.load %arg7[%88, %c0_34, %c56] : memref<1x8x96xbf16, #tpu.memory_space<vmem>>, vector<1x8x8xbf16>
    %90 = vector.shape_cast %89 : vector<1x8x8xbf16> to vector<8x8xbf16>
    %91 = arith.index_cast %12 : i32 to index
    %c0_35 = arith.constant 0 : index
    %c88 = arith.constant 88 : index
    %92 = vector.load %arg7[%91, %c0_35, %c88] : memref<1x8x96xbf16, #tpu.memory_space<vmem>>, vector<1x8x8xbf16>
    %93 = vector.shape_cast %92 : vector<1x8x8xbf16> to vector<8x8xbf16>
    %cst_36 = arith.constant dense<0.000000e+00> : vector<8x8xf32>
    %94 = tpu.matmul %87, %90, %cst_36 {dimension_numbers = #tpu.dot_dimension_numbers<[1], [1], [0], [0], [0, 0, 1, 0], [], []>} : vector<8x8xbf16>, vector<8x8xbf16>, vector<8x8xf32> -> vector<8x8xf32>
    %cst_37 = arith.constant dense<0xFF800000> : vector<8xf32>
    %95 = vector.multi_reduction <maximumf>, %94, %cst_37 [1] : vector<8x8xf32> to vector<8xf32>
    %96 = vector.shape_cast %95 : vector<8xf32> to vector<8x1xf32>
    %97 = vector.broadcast %96 : vector<8x1xf32> to vector<8x8xf32>
    %98 = arith.subf %94, %97 : vector<8x8xf32>
    %99 = math.exp %98 : vector<8x8xf32>
    %cst_38 = arith.constant dense<0.000000e+00> : vector<8xf32>
    %100 = vector.multi_reduction <add>, %99, %cst_38 [1] : vector<8x8xf32> to vector<8xf32>
    %101 = vector.shape_cast %100 : vector<8xf32> to vector<8x1xf32>
    %102 = vector.broadcast %cst_9 : f32 to vector<8x1xf32>
    %103 = arith.mulf %101, %102 : vector<8x1xf32>
    %104 = tpu.reciprocal %103 : vector<8x1xf32> -> vector<8x1xf32>
    %105 = vector.broadcast %104 : vector<8x1xf32> to vector<8x8xf32>
    %106 = arith.mulf %99, %105 : vector<8x8xf32>
    %107 = arith.truncf %106 : vector<8x8xf32> to vector<8x8xbf16>
    %cst_39 = arith.constant dense<0.000000e+00> : vector<8x8xf32>
    %108 = tpu.matmul %107, %93, %cst_39 {dimension_numbers = #tpu.dot_dimension_numbers<[1], [0], [0], [1], [0, 0, 1, 1], [], []>} : vector<8x8xbf16>, vector<8x8xbf16>, vector<8x8xf32> -> vector<8x8xf32>
    %109 = tpu.concatenate %36, %60, %84, %108 in 1 : vector<8x8xf32>, vector<8x8xf32>, vector<8x8xf32>, vector<8x8xf32> -> vector<8x32xf32>
    %110 = arith.truncf %109 : vector<8x32xf32> to vector<8x32xbf16>
    %111 = arith.index_cast %12 : i32 to index
    %c0_40 = arith.constant 0 : index
    %c0_41 = arith.constant 0 : index
    %112 = vector.load %arg8[%111, %c0_40, %c0_41] : memref<1x8x32xbf16, #tpu.memory_space<vmem>>, vector<1x8x32xbf16>
    %113 = vector.shape_cast %112 : vector<1x8x32xbf16> to vector<8x32xbf16>
    %114 = vector.shape_cast %110 : vector<8x32xbf16> to vector<1x8x32xbf16>
    tpu.vector_store %arg8[%111, %c0_40, %c0_41], %114 {strides = array<i32>} : memref<1x8x32xbf16, #tpu.memory_space<vmem>>, vector<1x8x32xbf16>,
    %c1_i32_42 = arith.constant 1 : i32
    %c0_43 = arith.constant 0 : index
    %c0_44 = arith.constant 0 : index
    %c0_45 = arith.constant 0 : index
    %115 = vector.load %arg8[%c0_43, %c0_44, %c0_45] : memref<1x8x32xbf16, #tpu.memory_space<vmem>>, vector<1x8x32xbf16>
    %116 = vector.shape_cast %115 : vector<1x8x32xbf16> to vector<8x32xbf16>
    %c0_46 = arith.constant 0 : index
    %c0_47 = arith.constant 0 : index
    %117 = vector.load %arg4[%c0_46, %c0_47] : memref<32x32xbf16, #tpu.memory_space<vmem>>, vector<32x32xbf16>
    %cst_48 = arith.constant dense<0.000000e+00> : vector<8x32xf32>
    %118 = tpu.matmul %116, %117, %cst_48 {dimension_numbers = #tpu.dot_dimension_numbers<[1], [0], [0], [1], [0, 0, 1, 1], [], []>} : vector<8x32xbf16>, vector<32x32xbf16>, vector<8x32xf32> -> vector<8x32xf32>
    %c0_49 = arith.constant 0 : index
    %c0_50 = arith.constant 0 : index
    %119 = vector.load %arg5[%c0_49, %c0_50] : memref<1x32xf32, #tpu.memory_space<vmem>>, vector<1x32xf32>
    %120 = vector.broadcast %119 : vector<1x32xf32> to vector<8x32xf32>
    %121 = arith.addf %118, %120 : vector<8x32xf32>
    %122 = vector.shape_cast %121 : vector<8x32xf32> to vector<1x8x32xf32>
    %c0_51 = arith.constant 0 : index
    %c0_52 = arith.constant 0 : index
    %c0_53 = arith.constant 0 : index
    %123 = vector.load %arg6[%c0_51, %c0_52, %c0_53] : memref<1x8x32xf32, #tpu.memory_space<vmem>>, vector<1x8x32xf32>
    tpu.vector_store %arg6[%c0_51, %c0_52, %c0_53], %122 {strides = array<i32>} : memref<1x8x32xf32, #tpu.memory_space<vmem>>, vector<1x8x32xf32>,
    return
  }
  func.func @transform_0(%arg0: i32) -> (i32, i32, i32) {
    %c0_i32 = arith.constant 0 : i32
    %c0_i32_0 = arith.constant 0 : i32
    %c0_i32_1 = arith.constant 0 : i32
    return %arg0, %c0_i32, %c0_i32_0 : i32, i32, i32
  }
  func.func @transform_1(%arg0: i32) -> (i32, i32) {
    %c0_i32 = arith.constant 0 : i32
    %c0_i32_0 = arith.constant 0 : i32
    %c0_i32_1 = arith.constant 0 : i32
    return %c0_i32, %c0_i32_0 : i32, i32
  }
  func.func @transform_2(%arg0: i32) -> (i32, i32) {
    %c0_i32 = arith.constant 0 : i32
    %c0_i32_0 = arith.constant 0 : i32
    %c0_i32_1 = arith.constant 0 : i32
    return %c0_i32, %c0_i32_0 : i32, i32
  }
  func.func @transform_3(%arg0: i32) -> (i32, i32) {
    %c0_i32 = arith.constant 0 : i32
    %c0_i32_0 = arith.constant 0 : i32
    %c0_i32_1 = arith.constant 0 : i32
    return %c0_i32, %c0_i32_0 : i32, i32
  }
  func.func @transform_4(%arg0: i32) -> (i32, i32) {
    %c0_i32 = arith.constant 0 : i32
    %c0_i32_0 = arith.constant 0 : i32
    %c0_i32_1 = arith.constant 0 : i32
    return %c0_i32, %c0_i32_0 : i32, i32
  }
  func.func @transform_5(%arg0: i32) -> (i32, i32, i32) {
    %c0_i32 = arith.constant 0 : i32
    %c0_i32_0 = arith.constant 0 : i32
    %c0_i32_1 = arith.constant 0 : i32
    return %arg0, %c0_i32, %c0_i32_0 : i32, i32, i32
  }
}

</mosaic_0001>

<llo_original>
// kernel: tpu_custom_call.1
$region0: #{tpu_custom_call.1}
  #allocation0 [shape = 'u32[]', space=smem, size = 0x4, offset = 0x4, fixed_abs, tag = 'smem constant byte address 0x4 - core index']
  #allocation1 [shape = 'u32[72,128]{1,0:T(1,128)}', space=vmem, size = 0x9000, scoped, tag = 'internal scratch']
  #allocation2 [shape = 'bf16[1,8,96]{2,1,0:T(8,128)(2,1)}', space=vmem, size = 0x800, scoped, tag = 'scratch operand']
  #allocation3 [shape = 'bf16[1,8,32]{2,1,0:T(8,128)(2,1)}', space=vmem, size = 0x800, scoped, tag = 'scratch operand']
  %s0 = inlined_call_operand.hbm [shape: f32[2,8,32], index: 0, kind: input, shape index: {}]
  %s1 = inlined_call_operand.hbm [shape: bf16[32,96], index: 1, kind: input, shape index: {}]
  %s2 = inlined_call_operand.vmem [shape: f32[1,96], index: 2, kind: input, shape index: {}]
  %s3 = inlined_call_operand.hbm [shape: bf16[32,32], index: 3, kind: input, shape index: {}]
  %s4 = inlined_call_operand.vmem [shape: f32[1,32], index: 4, kind: input, shape index: {}]
  %s5 = inlined_call_operand.hbm [shape: f32[2,8,32], index: 5, kind: output, shape index: {}]
  %s6 = sld [smem:[#allocation0]]
  $region65: #{tpu_custom_call.1} parent=0
    _
  %s8 = ssub.s32 1, %s6
  %s9 = scalar_select 0, %s8, %s6
  $region1: #{tpu_custom_call.1} parent=0
    #allocation4 [shape = 'u8[8192]{0}', space=vmem, size = 0x2000, scoped, tag = 'input window, operand 0']
    #allocation5 [shape = 's32[2]{0}', space=sflag, size = 0x8, scoped, tag = 'scoped memory for tpu_custom_call.1']
    #allocation6 [shape = 's32[2]{0}', space=sflag, size = 0x8, scoped, tag = 'scoped memory for tpu_custom_call.1']
    #allocation7 [shape = 'u8[8192]{0}', space=vmem, size = 0x2000, scoped, tag = 'input window, operand 1, single buffered']
    #allocation8 [shape = 's32[1]{0}', space=sflag, size = 0x4, scoped, tag = 'scoped memory for tpu_custom_call.1']
    #allocation9 [shape = 'u8[8192]{0}', space=vmem, size = 0x2000, scoped, tag = 'input window, operand 3, single buffered']
    #allocation10 [shape = 'u8[8192]{0}', space=vmem, size = 0x2000, scoped, tag = 'output window, operand 0']
    %10 = vsyncpa [#allocation5], 0
    %s11 = scalar_lea.sflag [#allocation5], 1
    %12 = vsyncpa %s11, 0
    %13 = vsyncpa [#allocation8], 0
    %14 = vsyncpa [#allocation6], 0
    %s15 = scalar_lea.sflag [#allocation6], 1
    %16 = vsyncpa %s15, 0
    loop: start=0, step=1, limit=4
    $region2: #{tpu_custom_call.1} parent=1 // loop_pre_header
      _
    $region3: #{tpu_custom_call.1} parent=1 // loop_header
      %s18 = sphi 0, %s22
      %p19 = scmp.ge.s32.totalorder %s18, 4
      %s28 = sphi 0, %s30
      %s31 = sphi 0, %s28
      %s32 = sphi 0, %s31
      %s48 = sphi 0, %s32
      %s52 = sphi 0, %s52
      %s54 = sphi 0, %s52
      %s55 = sphi 0, %s54
      %s69 = sphi 0, %s55
      %s73 = sphi 0, %s73
      %s75 = sphi 0, %s73
      %s76 = sphi 0, %s75
      %s90 = sphi 0, %s76
      %s94 = sphi 0, %s94
      %s96 = sphi 0, %s94
      %s97 = sphi 0, %s96
      %s111 = sphi 0, %s97
      %s115 = sphi 0, %s115
      %s117 = sphi 0, %s115
      %s118 = sphi 0, %s117
      %s132 = sphi 0, %s118
      %s138 = sphi 0, %s140
      %s141 = sphi 0, %s138
      %s142 = sphi 0, %s141
      %s158 = sphi 0, %s142
    $region4: #{tpu_custom_call.1} parent=1 // loop_header_branch
      %21 = sbr.rel (%p19) target = $region8
    $region5: #{tpu_custom_call.1} parent=1 // loop_body
      %s23 = ssub.s32 %s18, 1
      %s24 = ssub.s32 %s18, 2
      %s25 = sadd.s32 %s18, 1
      %s26 = ssub.s32 %s18, %s25
      %p27 = scmp.eq.s32.totalorder %s26, 0
      %s29 = sadd.s32 %s28, 1
      %s30 = scalar_select %p27, %s28, %s29
      %p33 = pneg %p27
      %p34 = scmp.eq.s32.totalorder %s18, 1
      %p35 = por %p33, %p34
      %p36 = scmp.ne.s32.totalorder %s28, %s31
      %p37 = scmp.eq.s32.totalorder %s18, 0
      %p38 = por %p36, %p37
      %p39 = scmp.ne.s32.totalorder %s28, %s31
      %p40 = scmp.eq.s32.totalorder %s23, 1
      %p41 = por %p39, %p40
      %p42 = scmp.ne.s32.totalorder %s31, %s32
      %p43 = scmp.eq.s32.totalorder %s23, 0
      %p44 = por %p42, %p43
      %p45 = scmp.ne.s32.totalorder %s31, %s32
      %p46 = scmp.eq.s32.totalorder %s24, 1
      %p47 = por %p45, %p46
      %p49 = scmp.ne.s32.totalorder %s32, %s48
      %p50 = scmp.eq.s32.totalorder %s24, 0
      %p51 = por %p49, %p50
      %s53 = sadd.s32 %s52, 1
      %p56 = scmp.eq.s32.totalorder %s18, 1
      %p57 = scmp.ne.s32.totalorder %s52, %s54
      %p58 = scmp.eq.s32.totalorder %s18, 0
      %p59 = por %p57, %p58
      %p60 = scmp.ne.s32.totalorder %s52, %s54
      %p61 = scmp.eq.s32.totalorder %s23, 1
      %p62 = por %p60, %p61
      %p63 = scmp.ne.s32.totalorder %s54, %s55
      %p64 = scmp.eq.s32.totalorder %s23, 0
      %p65 = por %p63, %p64
      %p66 = scmp.ne.s32.totalorder %s54, %s55
      %p67 = scmp.eq.s32.totalorder %s24, 1
      %p68 = por %p66, %p67
      %p70 = scmp.ne.s32.totalorder %s55, %s69
      %p71 = scmp.eq.s32.totalorder %s24, 0
      %p72 = por %p70, %p71
      %s74 = sadd.s32 %s73, 1
      %p77 = scmp.eq.s32.totalorder %s18, 1
      %p78 = scmp.ne.s32.totalorder %s73, %s75
      %p79 = scmp.eq.s32.totalorder %s18, 0
      %p80 = por %p78, %p79
      %p81 = scmp.ne.s32.totalorder %s73, %s75
      %p82 = scmp.eq.s32.totalorder %s23, 1
      %p83 = por %p81, %p82
      %p84 = scmp.ne.s32.totalorder %s75, %s76
      %p85 = scmp.eq.s32.totalorder %s23, 0
      %p86 = por %p84, %p85
      %p87 = scmp.ne.s32.totalorder %s75, %s76
      %p88 = scmp.eq.s32.totalorder %s24, 1
      %p89 = por %p87, %p88
      %p91 = scmp.ne.s32.totalorder %s76, %s90
      %p92 = scmp.eq.s32.totalorder %s24, 0
      %p93 = por %p91, %p92
      %s95 = sadd.s32 %s94, 1
      %p98 = scmp.eq.s32.totalorder %s18, 1
      %p99 = scmp.ne.s32.totalorder %s94, %s96
      %p100 = scmp.eq.s32.totalorder %s18, 0
      %p101 = por %p99, %p100
      %p102 = scmp.ne.s32.totalorder %s94, %s96
      %p103 = scmp.eq.s32.totalorder %s23, 1
      %p104 = por %p102, %p103
      %p105 = scmp.ne.s32.totalorder %s96, %s97
      %p106 = scmp.eq.s32.totalorder %s23, 0
      %p107 = por %p105, %p106
      %p108 = scmp.ne.s32.totalorder %s96, %s97
      %p109 = scmp.eq.s32.totalorder %s24, 1
      %p110 = por %p108, %p109
      %p112 = scmp.ne.s32.totalorder %s97, %s111
      %p113 = scmp.eq.s32.totalorder %s24, 0
      %p114 = por %p112, %p113
      %s116 = sadd.s32 %s115, 1
      %p119 = scmp.eq.s32.totalorder %s18, 1
      %p120 = scmp.ne.s32.totalorder %s115, %s117
      %p121 = scmp.eq.s32.totalorder %s18, 0
      %p122 = por %p120, %p121
      %p123 = scmp.ne.s32.totalorder %s115, %s117
      %p124 = scmp.eq.s32.totalorder %s23, 1
      %p125 = por %p123, %p124
      %p126 = scmp.ne.s32.totalorder %s117, %s118
      %p127 = scmp.eq.s32.totalorder %s23, 0
      %p128 = por %p126, %p127
      %p129 = scmp.ne.s32.totalorder %s117, %s118
      %p130 = scmp.eq.s32.totalorder %s24, 1
      %p131 = por %p129, %p130
      %p133 = scmp.ne.s32.totalorder %s118, %s132
      %p134 = scmp.eq.s32.totalorder %s24, 0
      %p135 = por %p133, %p134
      %s136 = ssub.s32 %s18, %s25
      %p137 = scmp.eq.s32.totalorder %s136, 0
      %s139 = sadd.s32 %s138, 1
      %s140 = scalar_select %p137, %s138, %s139
      %p143 = pneg %p137
      %p144 = scmp.eq.s32.totalorder %s18, 1
      %p145 = por %p143, %p144
      %p146 = scmp.ne.s32.totalorder %s138, %s141
      %p147 = scmp.eq.s32.totalorder %s18, 0
      %p148 = por %p146, %p147
      %p149 = scmp.ne.s32.totalorder %s138, %s141
      %p150 = scmp.eq.s32.totalorder %s23, 1
      %p151 = por %p149, %p150
      %p152 = scmp.ne.s32.totalorder %s141, %s142
      %p153 = scmp.eq.s32.totalorder %s23, 0
      %p154 = por %p152, %p153
      %p155 = scmp.ne.s32.totalorder %s141, %s142
      %p156 = scmp.eq.s32.totalorder %s24, 1
      %p157 = por %p155, %p156
      %p159 = scmp.ne.s32.totalorder %s142, %s158
      %p160 = scmp.eq.s32.totalorder %s24, 0
      %p161 = por %p159, %p160
      %p162 = scmp.le.s32.totalorder 1, %s18
      %p163 = scmp.lt.s32.totalorder %s18, 3
      %p164 = pnand %p162, %p163
      %p165 = pneg %p164
      // Predicated region
      $region9: #{tpu_custom_call.1} parent=5 // pred_check
        _
      $region10: #{tpu_custom_call.1} parent=5 // pred_check_branch
        %167 = sbr.rel (%p164) target = $region12
      $region11: #{tpu_custom_call.1} parent=5 // pred_region
        %s168 = ssub.s32 %s18, 1
        // Predicated region
        $region13: #{tpu_custom_call.1} parent=11 // pred_check
          %p169 = pneg %p65
        $region14: #{tpu_custom_call.1} parent=11 // pred_check_branch
          %171 = sbr.rel (%p169) target = $region16
        $region15: #{tpu_custom_call.1} parent=11 // pred_region
          %173 = vsyncadd [#allocation8], 0
          %s174 = sshll.u32 %s1, 4
          %s175 = int_to_ptr.hbm [resolvable:$true] %s174
          %s176 = sshll.u32 [#allocation7], 4
          %s177 = int_to_ptr.vmem [resolvable:$true] %s176
          %182 = dma.hbm_to_vmem [thread:$0]  %s175, 256, %s177, [#allocation8], 64, 64, 4
        $region16: #{tpu_custom_call.1} parent=11 // pred_fallthru
          _
        // Predicated region
        $region17: #{tpu_custom_call.1} parent=11 // pred_check
          %p183 = pneg %p86
        $region18: #{tpu_custom_call.1} parent=11 // pred_check_branch
          %185 = sbr.rel (%p183) target = $region20
        $region19: #{tpu_custom_call.1} parent=11 // pred_region
          _
        $region20: #{tpu_custom_call.1} parent=11 // pred_fallthru
          _
        // Predicated region
        $region21: #{tpu_custom_call.1} parent=11 // pred_check
          %p186 = pneg %p107
        $region22: #{tpu_custom_call.1} parent=11 // pred_check_branch
          %188 = sbr.rel (%p186) target = $region24
        $region23: #{tpu_custom_call.1} parent=11 // pred_region
          %190 = vsyncadd [#allocation8], 0
          %s191 = sshll.u32 %s3, 4
          %s192 = int_to_ptr.hbm [resolvable:$true] %s191
          %s193 = sshll.u32 [#allocation9], 4
          %s194 = int_to_ptr.vmem [resolvable:$true] %s193
          %199 = dma.hbm_to_vmem [thread:$0]  %s192, 256, %s194, [#allocation8], 64, 64, 4
        $region24: #{tpu_custom_call.1} parent=11 // pred_fallthru
          _
        // Predicated region
        $region25: #{tpu_custom_call.1} parent=11 // pred_check
          %p200 = pneg %p128
        $region26: #{tpu_custom_call.1} parent=11 // pred_check_branch
          %202 = sbr.rel (%p200) target = $region28
        $region27: #{tpu_custom_call.1} parent=11 // pred_region
          _
        $region28: #{tpu_custom_call.1} parent=11 // pred_fallthru
          _
      $region12: #{tpu_custom_call.1} parent=5 // pred_fallthru
        _
      %p203 = scmp.lt.s32.totalorder %s18, 2
      // Predicated region
      $region29: #{tpu_custom_call.1} parent=5 // pred_check
        %p204 = pneg %p203
      $region30: #{tpu_custom_call.1} parent=5 // pred_check_branch
        %206 = sbr.rel (%p204) target = $region32
      $region31: #{tpu_custom_call.1} parent=5 // pred_region
        // Predicated region
        $region33: #{tpu_custom_call.1} parent=31 // pred_check
          %p207 = pneg %p38
        $region34: #{tpu_custom_call.1} parent=31 // pred_check_branch
          %209 = sbr.rel (%p207) target = $region36
        $region35: #{tpu_custom_call.1} parent=31 // pred_region
          %s210 = sand.u32 %s28, 1
          %s211 = scalar_lea.sflag [#allocation5], %s210
          %s212 = sand.u32 %s28, 1
          %s213 = smul.addr %s212, 8
          %s214 = scalar_lea.vmem [#allocation4], %s213
          %216 = vsyncadd %s211, 0
          %s217 = smul.addr %s18, 8
          %s218 = scalar_lea.hbm %s0, %s217
          %s220 = sshll.u32 %s218, 4
          %s221 = int_to_ptr.hbm [resolvable:$true] %s220
          %s222 = sshll.u32 %s214, 4
          %s223 = int_to_ptr.vmem [resolvable:$true] %s222
          %225 = dma.hbm_to_vmem [thread:$0]  %s221, 128, %s223, %s211
        $region36: #{tpu_custom_call.1} parent=31 // pred_fallthru
          _
      $region32: #{tpu_custom_call.1} parent=5 // pred_fallthru
        _
      %p226 = scmp.le.s32.totalorder 1, %s18
      %p227 = scmp.lt.s32.totalorder %s18, 3
      %p228 = pnand %p226, %p227
      %p229 = pneg %p228
      // Predicated region
      $region37: #{tpu_custom_call.1} parent=5 // pred_check
        _
      $region38: #{tpu_custom_call.1} parent=5 // pred_check_branch
        %231 = sbr.rel (%p228) target = $region40
      $region39: #{tpu_custom_call.1} parent=5 // pred_region
        %s232 = ssub.s32 %s18, 1
        %s233 = sand.u32 %s31, 1
        %s234 = scalar_lea.sflag [#allocation5], %s233
        %s235 = sand.u32 %s31, 1
        %s236 = smul.addr %s235, 8
        %s237 = scalar_lea.vmem [#allocation4], %s236
        // Predicated region
        $region41: #{tpu_custom_call.1} parent=39 // pred_check
          %p238 = pneg %p44
        $region42: #{tpu_custom_call.1} parent=39 // pred_check_branch
          %240 = sbr.rel (%p238) target = $region44
        $region43: #{tpu_custom_call.1} parent=39 // pred_region
          %242 = dma.done %s234, 128
        $region44: #{tpu_custom_call.1} parent=39 // pred_fallthru
          _
        // Predicated region
        $region45: #{tpu_custom_call.1} parent=39 // pred_check
          %p243 = pneg %p65
        $region46: #{tpu_custom_call.1} parent=39 // pred_check_branch
          %245 = sbr.rel (%p243) target = $region48
        $region47: #{tpu_custom_call.1} parent=39 // pred_region
          %247 = dma.done [#allocation8], 256
        $region48: #{tpu_custom_call.1} parent=39 // pred_fallthru
          _
        // Predicated region
        $region49: #{tpu_custom_call.1} parent=39 // pred_check
          %p248 = pneg %p107
        $region50: #{tpu_custom_call.1} parent=39 // pred_check_branch
          %250 = sbr.rel (%p248) target = $region52
        $region51: #{tpu_custom_call.1} parent=39 // pred_region
          %252 = dma.done [#allocation8], 256
        $region52: #{tpu_custom_call.1} parent=39 // pred_fallthru
          _
        %s253 = sand.u32 %s31, 1
        %s254 = scalar_lea.sflag [#allocation5], %s253
        %s255 = sand.u32 %s31, 1
        %s256 = smul.addr %s255, 8
        %s257 = scalar_lea.vmem [#allocation4], %s256
        %p258 = pneg %p44
        %p259 = pneg %p41
        %p260 = pneg %p65
        %p261 = pneg %p62
        %p262 = pneg %p86
        %p263 = pneg %p83
        %p264 = pneg %p107
        %p265 = pneg %p104
        %p266 = pneg %p128
        %p267 = pneg %p125
        %p268 = pneg %p154
        %p269 = pneg %p151
        %s270 = sand.u32 %s141, 1
        %s271 = scalar_lea.sflag [#allocation6], %s270
        %s272 = sand.u32 %s141, 1
        %s273 = smul.addr %s272, 8
        %s274 = scalar_lea.vmem [#allocation10], %s273
        %v276 = vld [vmem:[%s237] sm:$0xff]
        %v277 = vpack.c.bf16 %v276, %v276
        %v278 = vld [vmem:[#allocation7] sm:$0xf]
        %v279 = vld [vmem:[#allocation7 + $0x4] sm:$0xf]
        %v280 = vld [vmem:[#allocation7 + $0x8] sm:$0xf]
        %v281 = vld [vmem:[#allocation7 + $0xc] sm:$0xf]
        %v282 = vld [vmem:[%s2] sm:$0x1]
        %v284 = vperm.slane %v282, 0
        %v290 = vunpack.c.l.b16 %v278
        %v291 = vunpack.c.l.b16 %v279
        %v292 = vunpack.c.l.b16 %v280
        %v293 = vunpack.c.l.b16 %v281
        %v294 = vpack.c.b16 %v291, %v290
        %v295 = vpack.c.b16 %v293, %v292
        %vm298 = vcmask 261120
        %v300 = vsel %vm298, %v277, 0
        %302 = vmatpush.bf16.msra.mxu0 0
        %303 = vmatpush.bf16.msra.mxu0 0
        %304 = vmatpush.bf16.msra.mxu0 0
        %305 = vmatpush.bf16.msra.mxu0 0
        %306 = vmatpush.bf16.msra.mxu0 0
        %307 = vmatpush.bf16.msra.mxu0 0
        %308 = vmatpush.bf16.msra.mxu0 %v295
        %309 = vmatpush.bf16.msra.mxu0 %v294
        %310 = vmatmul.bf16.gmra.mxu0 %v300
        %v311 = vpop.f32.mrf.mxu0
        %v312 = vadd.f32 %v284, %v311
        %v313 = vpop.f32.mrf.mxu0
        %314 = vdwg.mxu0
        %v315 = vpack.c.bf16 %v312, %v312
        %vm316 = vcmask 781312
        %317 = vst.msk [vmem:[#allocation2] sm:$0xf] %vm316, %v315
        %v318 = vld [vmem:[#allocation2] sm:$0xf]
        %v320 = vunpack.c.l.b16 %v318
        %v321 = vpack.c.b16 %v320, %v320
        %322 = vrot.lane.b32.xlu0 %v321, 96
        %v323 = vpop.permute.xlu0 %322
        %vm324 = vcmask 64512
        %v326 = vsel %vm324, %v318, 0
        %v329 = vsel %vm324, %v323, 0
        %331 = vmatpush.bf16.xpose.msra.mxu0 0
        %332 = vmatpush.bf16.xpose.msra.mxu0 0
        %333 = vmatpush.bf16.xpose.msra.mxu0 0
        %334 = vmatpush.bf16.xpose.msra.mxu0 0
        %335 = vmatpush.bf16.xpose.msra.mxu0 0
        %336 = vmatpush.bf16.xpose.msra.mxu0 0
        %337 = vmatpush.bf16.xpose.msra.mxu0 0
        %338 = vmatpush.bf16.xpose.msra.mxu0 %v329
        %339 = vmatmul.bf16.gmra.mxu0 %v326
        %v340 = vpop.f32.mrf.mxu0
        %v341 = vadd.f32 0.0, %v340
        %v342 = vpop.f32.mrf.mxu0
        %343 = vdwg.mxu0
        %v344 = vsel %vm324, %v341, -inf
        %345 = vmax.xlane.f32.xlu0 %v344
        %v346 = vpop.xlane.xlu0 %345
        %v347 = vsub.f32 %v341, %v346
        %v348 = vmul.f32 %v347, 1.442695
        %v349 = vpow.pop %v348
        %v350 = vsel %vm324, %v349, 0.0
        %351 = vadd.xlane.f32.xlu0 %v350
        %v352 = vpop.xlane.xlu0 %351
        %v353 = vmul.f32 %v352, 5.656854
        %v354 = vrcp.pop %v353
        %v355 = vmul.f32 %v353, %v354
        %v356 = vsub.f32 1.0, %v355
        %v357 = vmul.f32 %v354, %v356
        %v358 = vadd.f32 %v354, %v357
        %vm359 = vweird.f32 %v353
        %vm360 = vweird.f32 %v354
        %vm361 = vmor %vm359, %vm360
        %v362 = vsel %vm361, %v354, %v358
        %v363 = vand.u32 2147483647, %v353
        %vm364 = vcmp.eq.f32.partialorder %v363, 8.507059e+37
        %v365 = vand.u32 %v353, 2147483648
        %v366 = vor.u32 1.1754944e-38, %v365
        %v367 = vsel %vm364, %v366, %v362
        %v368 = vmul.f32 %v349, %v367
        %v369 = vpack.c.bf16 %v368, %v368
        %370 = vrot.lane.b32.xlu0 %v321, 64
        %v371 = vpop.permute.xlu0 %370
        %v373 = vsel %vm324, %v369, 0
        %vm375 = vcmask 1043456
        %v377 = vsel %vm375, %v371, 0
        %379 = vmatpush.bf16.msra.mxu0 0
        %380 = vmatpush.bf16.msra.mxu0 0
        %381 = vmatpush.bf16.msra.mxu0 0
        %382 = vmatpush.bf16.msra.mxu0 0
        %383 = vmatpush.bf16.msra.mxu0 0
        %384 = vmatpush.bf16.msra.mxu0 0
        %385 = vmatpush.bf16.msra.mxu0 0
        %386 = vmatpush.bf16.msra.mxu0 %v377
        %387 = vmatmul.bf16.gmra.mxu0 %v373
        %v388 = vpop.f32.mrf.mxu0
        %v389 = vadd.f32 0.0, %v388
        %v390 = vpop.f32.mrf.mxu0
        %391 = vdwg.mxu0
        %392 = vrot.lane.b32.xlu0 %v321, 120
        %v393 = vpop.permute.xlu0 %392
        %394 = vrot.lane.b32.xlu0 %v321, 88
        %v395 = vpop.permute.xlu0 %394
        %v397 = vsel %vm324, %v393, 0
        %v400 = vsel %vm324, %v395, 0
        %402 = vmatpush.bf16.xpose.msra.mxu0 0
        %403 = vmatpush.bf16.xpose.msra.mxu0 0
        %404 = vmatpush.bf16.xpose.msra.mxu0 0
        %405 = vmatpush.bf16.xpose.msra.mxu0 0
        %406 = vmatpush.bf16.xpose.msra.mxu0 0
        %407 = vmatpush.bf16.xpose.msra.mxu0 0
        %408 = vmatpush.bf16.xpose.msra.mxu0 0
        %409 = vmatpush.bf16.xpose.msra.mxu0 %v400
        %410 = vmatmul.bf16.gmra.mxu0 %v397
        %v411 = vpop.f32.mrf.mxu0
        %v412 = vadd.f32 0.0, %v411
        %v413 = vpop.f32.mrf.mxu0
        %414 = vdwg.mxu0
        %v415 = vsel %vm324, %v412, -inf
        %416 = vmax.xlane.f32.xlu0 %v415
        %v417 = vpop.xlane.xlu0 %416
        %v418 = vsub.f32 %v412, %v417
        %v419 = vmul.f32 %v418, 1.442695
        %v420 = vpow.pop %v419
        %v421 = vsel %vm324, %v420, 0.0
        %422 = vadd.xlane.f32.xlu0 %v421
        %v423 = vpop.xlane.xlu0 %422
        %v424 = vmul.f32 %v423, 5.656854
        %v425 = vrcp.pop %v424
        %v426 = vmul.f32 %v424, %v425
        %v427 = vsub.f32 1.0, %v426
        %v428 = vmul.f32 %v425, %v427
        %v429 = vadd.f32 %v425, %v428
        %vm430 = vweird.f32 %v424
        %vm431 = vweird.f32 %v425
        %vm432 = vmor %vm430, %vm431
        %v433 = vsel %vm432, %v425, %v429
        %v434 = vand.u32 2147483647, %v424
        %vm435 = vcmp.eq.f32.partialorder %v434, 8.507059e+37
        %v436 = vand.u32 %v424, 2147483648
        %v437 = vor.u32 1.1754944e-38, %v436
        %v438 = vsel %vm435, %v437, %v433
        %v439 = vmul.f32 %v420, %v438
        %v440 = vpack.c.bf16 %v439, %v439
        %441 = vrot.lane.b32.xlu0 %v321, 56
        %v442 = vpop.permute.xlu0 %441
        %v444 = vsel %vm324, %v440, 0
        %v447 = vsel %vm375, %v442, 0
        %449 = vmatpush.bf16.msra.mxu0 0
        %450 = vmatpush.bf16.msra.mxu0 0
        %451 = vmatpush.bf16.msra.mxu0 0
        %452 = vmatpush.bf16.msra.mxu0 0
        %453 = vmatpush.bf16.msra.mxu0 0
        %454 = vmatpush.bf16.msra.mxu0 0
        %455 = vmatpush.bf16.msra.mxu0 0
        %456 = vmatpush.bf16.msra.mxu0 %v447
        %457 = vmatmul.bf16.gmra.mxu0 %v444
        %v458 = vpop.f32.mrf.mxu0
        %v459 = vadd.f32 0.0, %v458
        %v460 = vpop.f32.mrf.mxu0
        %461 = vdwg.mxu0
        %462 = vrot.lane.b32.xlu0 %v321, 112
        %v463 = vpop.permute.xlu0 %462
        %464 = vrot.lane.b32.xlu0 %v321, 80
        %v465 = vpop.permute.xlu0 %464
        %v467 = vsel %vm324, %v463, 0
        %v470 = vsel %vm324, %v465, 0
        %472 = vmatpush.bf16.xpose.msra.mxu0 0
        %473 = vmatpush.bf16.xpose.msra.mxu0 0
        %474 = vmatpush.bf16.xpose.msra.mxu0 0
        %475 = vmatpush.bf16.xpose.msra.mxu0 0
        %476 = vmatpush.bf16.xpose.msra.mxu0 0
        %477 = vmatpush.bf16.xpose.msra.mxu0 0
        %478 = vmatpush.bf16.xpose.msra.mxu0 0
        %479 = vmatpush.bf16.xpose.msra.mxu0 %v470
        %480 = vmatmul.bf16.gmra.mxu0 %v467
        %v481 = vpop.f32.mrf.mxu0
        %v482 = vadd.f32 0.0, %v481
        %v483 = vpop.f32.mrf.mxu0
        %484 = vdwg.mxu0
        %v485 = vsel %vm324, %v482, -inf
        %486 = vmax.xlane.f32.xlu0 %v485
        %v487 = vpop.xlane.xlu0 %486
        %v488 = vsub.f32 %v482, %v487
        %v489 = vmul.f32 %v488, 1.442695
        %v490 = vpow.pop %v489
        %v491 = vsel %vm324, %v490, 0.0
        %492 = vadd.xlane.f32.xlu0 %v491
        %v493 = vpop.xlane.xlu0 %492
        %v494 = vmul.f32 %v493, 5.656854
        %v495 = vrcp.pop %v494
        %v496 = vmul.f32 %v494, %v495
        %v497 = vsub.f32 1.0, %v496
        %v498 = vmul.f32 %v495, %v497
        %v499 = vadd.f32 %v495, %v498
        %vm500 = vweird.f32 %v494
        %vm501 = vweird.f32 %v495
        %vm502 = vmor %vm500, %vm501
        %v503 = vsel %vm502, %v495, %v499
        %v504 = vand.u32 2147483647, %v494
        %vm505 = vcmp.eq.f32.partialorder %v504, 8.507059e+37
        %v506 = vand.u32 %v494, 2147483648
        %v507 = vor.u32 1.1754944e-38, %v506
        %v508 = vsel %vm505, %v507, %v503
        %v509 = vmul.f32 %v490, %v508
        %v510 = vpack.c.bf16 %v509, %v509
        %511 = vrot.lane.b32.xlu0 %v321, 48
        %v512 = vpop.permute.xlu0 %511
        %v514 = vsel %vm324, %v510, 0
        %v517 = vsel %vm375, %v512, 0
        %519 = vmatpush.bf16.msra.mxu0 0
        %520 = vmatpush.bf16.msra.mxu0 0
        %521 = vmatpush.bf16.msra.mxu0 0
        %522 = vmatpush.bf16.msra.mxu0 0
        %523 = vmatpush.bf16.msra.mxu0 0
        %524 = vmatpush.bf16.msra.mxu0 0
        %525 = vmatpush.bf16.msra.mxu0 0
        %526 = vmatpush.bf16.msra.mxu0 %v517
        %527 = vmatmul.bf16.gmra.mxu0 %v514
        %v528 = vpop.f32.mrf.mxu0
        %v529 = vadd.f32 0.0, %v528
        %v530 = vpop.f32.mrf.mxu0
        %531 = vdwg.mxu0
        %532 = vrot.lane.b32.xlu0 %v321, 104
        %v533 = vpop.permute.xlu0 %532
        %534 = vrot.lane.b32.xlu0 %v321, 72
        %v535 = vpop.permute.xlu0 %534
        %v537 = vsel %vm324, %v533, 0
        %v540 = vsel %vm324, %v535, 0
        %542 = vmatpush.bf16.xpose.msra.mxu0 0
        %543 = vmatpush.bf16.xpose.msra.mxu0 0
        %544 = vmatpush.bf16.xpose.msra.mxu0 0
        %545 = vmatpush.bf16.xpose.msra.mxu0 0
        %546 = vmatpush.bf16.xpose.msra.mxu0 0
        %547 = vmatpush.bf16.xpose.msra.mxu0 0
        %548 = vmatpush.bf16.xpose.msra.mxu0 0
        %549 = vmatpush.bf16.xpose.msra.mxu0 %v540
        %550 = vmatmul.bf16.gmra.mxu0 %v537
        %v551 = vpop.f32.mrf.mxu0
        %v552 = vadd.f32 0.0, %v551
        %v553 = vpop.f32.mrf.mxu0
        %554 = vdwg.mxu0
        %v555 = vsel %vm324, %v552, -inf
        %556 = vmax.xlane.f32.xlu0 %v555
        %v557 = vpop.xlane.xlu0 %556
        %v558 = vsub.f32 %v552, %v557
        %v559 = vmul.f32 %v558, 1.442695
        %v560 = vpow.pop %v559
        %v561 = vsel %vm324, %v560, 0.0
        %562 = vadd.xlane.f32.xlu0 %v561
        %v563 = vpop.xlane.xlu0 %562
        %v564 = vmul.f32 %v563, 5.656854
        %v565 = vrcp.pop %v564
        %v566 = vmul.f32 %v564, %v565
        %v567 = vsub.f32 1.0, %v566
        %v568 = vmul.f32 %v565, %v567
        %v569 = vadd.f32 %v565, %v568
        %vm570 = vweird.f32 %v564
        %vm571 = vweird.f32 %v565
        %vm572 = vmor %vm570, %vm571
        %v573 = vsel %vm572, %v565, %v569
        %v574 = vand.u32 2147483647, %v564
        %vm575 = vcmp.eq.f32.partialorder %v574, 8.507059e+37
        %v576 = vand.u32 %v564, 2147483648
        %v577 = vor.u32 1.1754944e-38, %v576
        %v578 = vsel %vm575, %v577, %v573
        %v579 = vmul.f32 %v560, %v578
        %v580 = vpack.c.bf16 %v579, %v579
        %581 = vrot.lane.b32.xlu0 %v321, 40
        %v582 = vpop.permute.xlu0 %581
        %v584 = vsel %vm324, %v580, 0
        %v587 = vsel %vm375, %v582, 0
        %589 = vmatpush.bf16.msra.mxu0 0
        %590 = vmatpush.bf16.msra.mxu0 0
        %591 = vmatpush.bf16.msra.mxu0 0
        %592 = vmatpush.bf16.msra.mxu0 0
        %593 = vmatpush.bf16.msra.mxu0 0
        %594 = vmatpush.bf16.msra.mxu0 0
        %595 = vmatpush.bf16.msra.mxu0 0
        %596 = vmatpush.bf16.msra.mxu0 %v587
        %597 = vmatmul.bf16.gmra.mxu0 %v584
        %v598 = vpop.f32.mrf.mxu0
        %v599 = vadd.f32 0.0, %v598
        %v600 = vpop.f32.mrf.mxu0
        %601 = vdwg.mxu0
        %603 = vrot.lane.b32.xlu0 %v459, 8
        %v604 = vpop.permute.xlu0 %603
        %607 = vrot.lane.b32.xlu0 %v529, 16
        %v608 = vpop.permute.xlu0 %607
        %611 = vrot.lane.b32.xlu0 %v599, 24
        %v612 = vpop.permute.xlu0 %611
        %v614 = vsel %vm324, %v389, %v604
        %vm615 = vcmask 130048
        %v616 = vsel %vm615, %v614, %v608
        %vm617 = vcmask 195584
        %v618 = vsel %vm617, %v616, %v612
        %v619 = vpack.c.bf16 %v618, %v618
        %vm620 = vcmask 257024
        %621 = vst.msk [vmem:[#allocation3] sm:$0xf] %vm620, %v619
        %v622 = vld [vmem:[#allocation3] sm:$0xf]
        %v623 = vld [vmem:[#allocation9] sm:$0xf]
        %v624 = vld [vmem:[#allocation9 + $0x4] sm:$0xf]
        %v625 = vld [vmem:[#allocation9 + $0x8] sm:$0xf]
        %v626 = vld [vmem:[#allocation9 + $0xc] sm:$0xf]
        %v627 = vld [vmem:[%s4] sm:$0x1]
        %v629 = vperm.slane %v627, 0
        %v635 = vunpack.c.l.b16 %v623
        %v636 = vunpack.c.l.b16 %v624
        %v637 = vunpack.c.l.b16 %v625
        %v638 = vunpack.c.l.b16 %v626
        %v639 = vpack.c.b16 %v636, %v635
        %v640 = vpack.c.b16 %v638, %v637
        %v644 = vsel %vm298, %v622, 0
        %646 = vmatpush.bf16.msra.mxu0 0
        %647 = vmatpush.bf16.msra.mxu0 0
        %648 = vmatpush.bf16.msra.mxu0 0
        %649 = vmatpush.bf16.msra.mxu0 0
        %650 = vmatpush.bf16.msra.mxu0 0
        %651 = vmatpush.bf16.msra.mxu0 0
        %652 = vmatpush.bf16.msra.mxu0 %v640
        %653 = vmatpush.bf16.msra.mxu0 %v639
        %654 = vmatmul.bf16.gmra.mxu0 %v644
        %v655 = vpop.f32.mrf.mxu0
        %v656 = vadd.f32 %v629, %v655
        %v657 = vpop.f32.mrf.mxu0
        %658 = vdwg.mxu0
        %659 = vst.msk [vmem:[%s274] sm:$0xff] %vm298, %v656
        %s660 = sand.u32 %s141, 1
        %s661 = scalar_lea.sflag [#allocation6], %s660
        %s662 = sand.u32 %s141, 1
        %s663 = smul.addr %s662, 8
        %s664 = scalar_lea.vmem [#allocation10], %s663
        // Predicated region
        $region53: #{tpu_custom_call.1} parent=39 // pred_check
          %p665 = pneg %p151
        $region54: #{tpu_custom_call.1} parent=39 // pred_check_branch
          %667 = sbr.rel (%p665) target = $region56
        $region55: #{tpu_custom_call.1} parent=39 // pred_region
          %669 = vsyncadd %s661, 0
          %s670 = smul.addr %s23, 8
          %s671 = scalar_lea.hbm %s5, %s670
          %s673 = sshll.u32 %s664, 4
          %s674 = int_to_ptr.vmem [resolvable:$true] %s673
          %s675 = sshll.u32 %s671, 4
          %s676 = int_to_ptr.hbm [resolvable:$true] %s675
          %678 = dma.vmem_to_hbm [thread:$0]  %s674, 128, %s676, %s661
        $region56: #{tpu_custom_call.1} parent=39 // pred_fallthru
          _
      $region40: #{tpu_custom_call.1} parent=5 // pred_fallthru
        _
      %p679 = scmp.le.s32.totalorder 2, %s18
      // Predicated region
      $region57: #{tpu_custom_call.1} parent=5 // pred_check
        %p680 = pneg %p679
      $region58: #{tpu_custom_call.1} parent=5 // pred_check_branch
        %682 = sbr.rel (%p680) target = $region60
      $region59: #{tpu_custom_call.1} parent=5 // pred_region
        %s683 = ssub.s32 %s18, 2
        // Predicated region
        $region61: #{tpu_custom_call.1} parent=59 // pred_check
          %p684 = pneg %p157
        $region62: #{tpu_custom_call.1} parent=59 // pred_check_branch
          %686 = sbr.rel (%p684) target = $region64
        $region63: #{tpu_custom_call.1} parent=59 // pred_region
          %s687 = sand.u32 %s142, 1
          %s688 = scalar_lea.sflag [#allocation6], %s687
          %s689 = sand.u32 %s142, 1
          %s690 = smul.addr %s689, 8
          %s691 = scalar_lea.vmem [#allocation10], %s690
          %693 = dma.done %s688, 128
        $region64: #{tpu_custom_call.1} parent=59 // pred_fallthru
          _
      $region60: #{tpu_custom_call.1} parent=5 // pred_fallthru
        _
    $region6: #{tpu_custom_call.1} parent=1 // loop_footer
      %s22 = sadd.s32 1, %s18
    $region7: #{tpu_custom_call.1} parent=1 // loop_footer_branch
      %17 = sbr.rel target = $region3
    $region8: #{tpu_custom_call.1} parent=1 // loop_exit
      _
    %694 = vsyncpa [#allocation5], 1
    %s695 = scalar_lea.sflag [#allocation5], 1
    %696 = vsyncpa %s695, 1
    %697 = vsyncpa [#allocation8], 1
    %698 = vsyncpa [#allocation6], 1
    %s699 = scalar_lea.sflag [#allocation6], 1
    %700 = vsyncpa %s699, 1

// kernel: tpu_custom_call.1
$region0: #{tpu_custom_call.1}
  #allocation0 [shape = 'u32[]', space=smem, size = 0x4, offset = 0x4, fixed_abs, tag = 'smem constant byte address 0x4 - core index']
  #allocation1 [shape = 'u32[72,128]{1,0:T(1,128)}', space=vmem, size = 0x9000, scoped, tag = 'internal scratch']
  #allocation2 [shape = 'bf16[1,8,96]{2,1,0:T(8,128)(2,1)}', space=vmem, size = 0x800, scoped, tag = 'scratch operand']
  #allocation3 [shape = 'bf16[1,8,32]{2,1,0:T(8,128)(2,1)}', space=vmem, size = 0x800, scoped, tag = 'scratch operand']
  %s0 = inlined_call_operand.hbm [shape: f32[2,8,32], index: 0, kind: input, shape index: {}]
  %s1 = inlined_call_operand.hbm [shape: bf16[32,96], index: 1, kind: input, shape index: {}]
  %s2 = inlined_call_operand.vmem [shape: f32[1,96], index: 2, kind: input, shape index: {}]
  %s3 = inlined_call_operand.hbm [shape: bf16[32,32], index: 3, kind: input, shape index: {}]
  %s4 = inlined_call_operand.vmem [shape: f32[1,32], index: 4, kind: input, shape index: {}]
  %s5 = inlined_call_operand.hbm [shape: f32[2,8,32], index: 5, kind: output, shape index: {}]
  %s6 = sld [smem:[#allocation0]]
  $region65: #{tpu_custom_call.1} parent=0
    _
  %s8 = ssub.s32 1, %s6
  %s9 = scalar_select 0, %s8, %s6
  $region1: #{tpu_custom_call.1} parent=0
    #allocation4 [shape = 'u8[8192]{0}', space=vmem, size = 0x2000, scoped, tag = 'input window, operand 0']
    #allocation5 [shape = 's32[2]{0}', space=sflag, size = 0x8, scoped, tag = 'scoped memory for tpu_custom_call.1']
    #allocation6 [shape = 's32[2]{0}', space=sflag, size = 0x8, scoped, tag = 'scoped memory for tpu_custom_call.1']
    #allocation7 [shape = 'u8[8192]{0}', space=vmem, size = 0x2000, scoped, tag = 'input window, operand 1, single buffered']
    #allocation8 [shape = 's32[1]{0}', space=sflag, size = 0x4, scoped, tag = 'scoped memory for tpu_custom_call.1']
    #allocation9 [shape = 'u8[8192]{0}', space=vmem, size = 0x2000, scoped, tag = 'input window, operand 3, single buffered']
    #allocation10 [shape = 'u8[8192]{0}', space=vmem, size = 0x2000, scoped, tag = 'output window, operand 0']
    %10 = vsyncpa [#allocation5], 0
    %s11 = scalar_lea.sflag [#allocation5], 1
    %12 = vsyncpa %s11, 0
    %13 = vsyncpa [#allocation8], 0
    %14 = vsyncpa [#allocation6], 0
    %s15 = scalar_lea.sflag [#allocation6], 1
    %16 = vsyncpa %s15, 0
    loop: start=0, step=1, limit=4
    $region2: #{tpu_custom_call.1} parent=1 // loop_pre_header
      _
    $region3: #{tpu_custom_call.1} parent=1 // loop_header
      %s18 = sphi 0, %s22
      %p19 = scmp.ge.s32.totalorder %s18, 4
      %s28 = sphi 0, %s30
      %s31 = sphi 0, %s28
      %s32 = sphi 0, %s31
      %s48 = sphi 0, %s32
      %s52 = sphi 0, %s52
      %s54 = sphi 0, %s52
      %s55 = sphi 0, %s54
      %s69 = sphi 0, %s55
      %s73 = sphi 0, %s73
      %s75 = sphi 0, %s73
      %s76 = sphi 0, %s75
      %s90 = sphi 0, %s76
      %s94 = sphi 0, %s94
      %s96 = sphi 0, %s94
      %s97 = sphi 0, %s96
      %s111 = sphi 0, %s97
      %s115 = sphi 0, %s115
      %s117 = sphi 0, %s115
      %s118 = sphi 0, %s117
      %s132 = sphi 0, %s118
      %s138 = sphi 0, %s140
      %s141 = sphi 0, %s138
      %s142 = sphi 0, %s141
      %s158 = sphi 0, %s142
    $region4: #{tpu_custom_call.1} parent=1 // loop_header_branch
      %21 = sbr.rel (%p19) target = $region8
    $region5: #{tpu_custom_call.1} parent=1 // loop_body
      %s23 = ssub.s32 %s18, 1
      %s24 = ssub.s32 %s18, 2
      %s25 = sadd.s32 %s18, 1
      %s26 = ssub.s32 %s18, %s25
      %p27 = scmp.eq.s32.totalorder %s26, 0
      %s29 = sadd.s32 %s28, 1
      %s30 = scalar_select %p27, %s28, %s29
      %p33 = pneg %p27
      %p34 = scmp.eq.s32.totalorder %s18, 1
      %p35 = por %p33, %p34
      %p36 = scmp.ne.s32.totalorder %s28, %s31
      %p37 = scmp.eq.s32.totalorder %s18, 0
      %p38 = por %p36, %p37
      %p39 = scmp.ne.s32.totalorder %s28, %s31
      %p40 = scmp.eq.s32.totalorder %s23, 1
      %p41 = por %p39, %p40
      %p42 = scmp.ne.s32.totalorder %s31, %s32
      %p43 = scmp.eq.s32.totalorder %s23, 0
      %p44 = por %p42, %p43
      %p45 = scmp.ne.s32.totalorder %s31, %s32
      %p46 = scmp.eq.s32.totalorder %s24, 1
      %p47 = por %p45, %p46
      %p49 = scmp.ne.s32.totalorder %s32, %s48
      %p50 = scmp.eq.s32.totalorder %s24, 0
      %p51 = por %p49, %p50
      %s53 = sadd.s32 %s52, 1
      %p56 = scmp.eq.s32.totalorder %s18, 1
      %p57 = scmp.ne.s32.totalorder %s52, %s54
      %p58 = scmp.eq.s32.totalorder %s18, 0
      %p59 = por %p57, %p58
      %p60 = scmp.ne.s32.totalorder %s52, %s54
      %p61 = scmp.eq.s32.totalorder %s23, 1
      %p62 = por %p60, %p61
      %p63 = scmp.ne.s32.totalorder %s54, %s55
      %p64 = scmp.eq.s32.totalorder %s23, 0
      %p65 = por %p63, %p64
      %p66 = scmp.ne.s32.totalorder %s54, %s55
      %p67 = scmp.eq.s32.totalorder %s24, 1
      %p68 = por %p66, %p67
      %p70 = scmp.ne.s32.totalorder %s55, %s69
      %p71 = scmp.eq.s32.totalorder %s24, 0
      %p72 = por %p70, %p71
      %s74 = sadd.s32 %s73, 1
      %p77 = scmp.eq.s32.totalorder %s18, 1
      %p78 = scmp.ne.s32.totalorder %s73, %s75
      %p79 = scmp.eq.s32.totalorder %s18, 0
      %p80 = por %p78, %p79
      %p81 = scmp.ne.s32.totalorder %s73, %s75
      %p82 = scmp.eq.s32.totalorder %s23, 1
      %p83 = por %p81, %p82
      %p84 = scmp.ne.s32.totalorder %s75, %s76
      %p85 = scmp.eq.s32.totalorder %s23, 0
      %p86 = por %p84, %p85
      %p87 = scmp.ne.s32.totalorder %s75, %s76
      %p88 = scmp.eq.s32.totalorder %s24, 1
      %p89 = por %p87, %p88
      %p91 = scmp.ne.s32.totalorder %s76, %s90
      %p92 = scmp.eq.s32.totalorder %s24, 0
      %p93 = por %p91, %p92
      %s95 = sadd.s32 %s94, 1
      %p98 = scmp.eq.s32.totalorder %s18, 1
      %p99 = scmp.ne.s32.totalorder %s94, %s96
      %p100 = scmp.eq.s32.totalorder %s18, 0
      %p101 = por %p99, %p100
      %p102 = scmp.ne.s32.totalorder %s94, %s96
      %p103 = scmp.eq.s32.totalorder %s23, 1
      %p104 = por %p102, %p103
      %p105 = scmp.ne.s32.totalorder %s96, %s97
      %p106 = scmp.eq.s32.totalorder %s23, 0
      %p107 = por %p105, %p106
      %p108 = scmp.ne.s32.totalorder %s96, %s97
      %p109 = scmp.eq.s32.totalorder %s24, 1
      %p110 = por %p108, %p109
      %p112 = scmp.ne.s32.totalorder %s97, %s111
      %p113 = scmp.eq.s32.totalorder %s24, 0
      %p114 = por %p112, %p113
      %s116 = sadd.s32 %s115, 1
      %p119 = scmp.eq.s32.totalorder %s18, 1
      %p120 = scmp.ne.s32.totalorder %s115, %s117
      %p121 = scmp.eq.s32.totalorder %s18, 0
      %p122 = por %p120, %p121
      %p123 = scmp.ne.s32.totalorder %s115, %s117
      %p124 = scmp.eq.s32.totalorder %s23, 1
      %p125 = por %p123, %p124
      %p126 = scmp.ne.s32.totalorder %s117, %s118
      %p127 = scmp.eq.s32.totalorder %s23, 0
      %p128 = por %p126, %p127
      %p129 = scmp.ne.s32.totalorder %s117, %s118
      %p130 = scmp.eq.s32.totalorder %s24, 1
      %p131 = por %p129, %p130
      %p133 = scmp.ne.s32.totalorder %s118, %s132
      %p134 = scmp.eq.s32.totalorder %s24, 0
      %p135 = por %p133, %p134
      %s136 = ssub.s32 %s18, %s25
      %p137 = scmp.eq.s32.totalorder %s136, 0
      %s139 = sadd.s32 %s138, 1
      %s140 = scalar_select %p137, %s138, %s139
      %p143 = pneg %p137
      %p144 = scmp.eq.s32.totalorder %s18, 1
      %p145 = por %p143, %p144
      %p146 = scmp.ne.s32.totalorder %s138, %s141
      %p147 = scmp.eq.s32.totalorder %s18, 0
      %p148 = por %p146, %p147
      %p149 = scmp.ne.s32.totalorder %s138, %s141
      %p150 = scmp.eq.s32.totalorder %s23, 1
      %p151 = por %p149, %p150
      %p152 = scmp.ne.s32.totalorder %s141, %s142
      %p153 = scmp.eq.s32.totalorder %s23, 0
      %p154 = por %p152, %p153
      %p155 = scmp.ne.s32.totalorder %s141, %s142
      %p156 = scmp.eq.s32.totalorder %s24, 1
      %p157 = por %p155, %p156
      %p159 = scmp.ne.s32.totalorder %s142, %s158
      %p160 = scmp.eq.s32.totalorder %s24, 0
      %p161 = por %p159, %p160
      %p162 = scmp.le.s32.totalorder 1, %s18
      %p163 = scmp.lt.s32.totalorder %s18, 3
      %p164 = pnand %p162, %p163
      %p165 = pneg %p164
      // Predicated region
      $region9: #{tpu_custom_call.1} parent=5 // pred_check
        _
      $region10: #{tpu_custom_call.1} parent=5 // pred_check_branch
        %167 = sbr.rel (%p164) target = $region12
      $region11: #{tpu_custom_call.1} parent=5 // pred_region
        %s168 = ssub.s32 %s18, 1
        // Predicated region
        $region13: #{tpu_custom_call.1} parent=11 // pred_check
          %p169 = pneg %p65
        $region14: #{tpu_custom_call.1} parent=11 // pred_check_branch
          %171 = sbr.rel (%p169) target = $region16
        $region15: #{tpu_custom_call.1} parent=11 // pred_region
          %173 = vsyncadd [#allocation8], 0
          %s174 = sshll.u32 %s1, 4
          %s175 = int_to_ptr.hbm [resolvable:$true] %s174
          %s176 = sshll.u32 [#allocation7], 4
          %s177 = int_to_ptr.vmem [resolvable:$true] %s176
          %182 = dma.hbm_to_vmem [thread:$0]  %s175, 256, %s177, [#allocation8], 64, 64, 4
        $region16: #{tpu_custom_call.1} parent=11 // pred_fallthru
          _
        // Predicated region
        $region17: #{tpu_custom_call.1} parent=11 // pred_check
          %p183 = pneg %p86
        $region18: #{tpu_custom_call.1} parent=11 // pred_check_branch
          %185 = sbr.rel (%p183) target = $region20
        $region19: #{tpu_custom_call.1} parent=11 // pred_region
          _
        $region20: #{tpu_custom_call.1} parent=11 // pred_fallthru
          _
        // Predicated region
        $region21: #{tpu_custom_call.1} parent=11 // pred_check
          %p186 = pneg %p107
        $region22: #{tpu_custom_call.1} parent=11 // pred_check_branch
          %188 = sbr.rel (%p186) target = $region24
        $region23: #{tpu_custom_call.1} parent=11 // pred_region
          %190 = vsyncadd [#allocation8], 0
          %s191 = sshll.u32 %s3, 4
          %s192 = int_to_ptr.hbm [resolvable:$true] %s191
          %s193 = sshll.u32 [#allocation9], 4
          %s194 = int_to_ptr.vmem [resolvable:$true] %s193
          %199 = dma.hbm_to_vmem [thread:$0]  %s192, 256, %s194, [#allocation8], 64, 64, 4
        $region24: #{tpu_custom_call.1} parent=11 // pred_fallthru
          _
        // Predicated region
        $region25: #{tpu_custom_call.1} parent=11 // pred_check
          %p200 = pneg %p128
        $region26: #{tpu_custom_call.1} parent=11 // pred_check_branch
          %202 = sbr.rel (%p200) target = $region28
        $region27: #{tpu_custom_call.1} parent=11 // pred_region
          _
        $region28: #{tpu_custom_call.1} parent=11 // pred_fallthru
          _
      $region12: #{tpu_custom_call.1} parent=5 // pred_fallthru
        _
      %p203 = scmp.lt.s32.totalorder %s18, 2
      // Predicated region
      $region29: #{tpu_custom_call.1} parent=5 // pred_check
        %p204 = pneg %p203
      $region30: #{tpu_custom_call.1} parent=5 // pred_check_branch
        %206 = sbr.rel (%p204) target = $region32
      $region31: #{tpu_custom_call.1} parent=5 // pred_region
        // Predicated region
        $region33: #{tpu_custom_call.1} parent=31 // pred_check
          %p207 = pneg %p38
        $region34: #{tpu_custom_call.1} parent=31 // pred_check_branch
          %209 = sbr.rel (%p207) target = $region36
        $region35: #{tpu_custom_call.1} parent=31 // pred_region
          %s210 = sand.u32 %s28, 1
          %s211 = scalar_lea.sflag [#allocation5], %s210
          %s212 = sand.u32 %s28, 1
          %s213 = smul.addr %s212, 8
          %s214 = scalar_lea.vmem [#allocation4], %s213
          %216 = vsyncadd %s211, 0
          %s217 = smul.addr %s18, 8
          %s218 = scalar_lea.hbm %s0, %s217
          %s220 = sshll.u32 %s218, 4
          %s221 = int_to_ptr.hbm [resolvable:$true] %s220
          %s222 = sshll.u32 %s214, 4
          %s223 = int_to_ptr.vmem [resolvable:$true] %s222
          %225 = dma.hbm_to_vmem [thread:$0]  %s221, 128, %s223, %s211
        $region36: #{tpu_custom_call.1} parent=31 // pred_fallthru
          _
      $region32: #{tpu_custom_call.1} parent=5 // pred_fallthru
        _
      %p226 = scmp.le.s32.totalorder 1, %s18
      %p227 = scmp.lt.s32.totalorder %s18, 3
      %p228 = pnand %p226, %p227
      %p229 = pneg %p228
      // Predicated region
      $region37: #{tpu_custom_call.1} parent=5 // pred_check
        _
      $region38: #{tpu_custom_call.1} parent=5 // pred_check_branch
        %231 = sbr.rel (%p228) target = $region40
      $region39: #{tpu_custom_call.1} parent=5 // pred_region
        %s232 = ssub.s32 %s18, 1
        %s233 = sand.u32 %s31, 1
        %s234 = scalar_lea.sflag [#allocation5], %s233
        %s235 = sand.u32 %s31, 1
        %s236 = smul.addr %s235, 8
        %s237 = scalar_lea.vmem [#allocation4], %s236
        // Predicated region
        $region41: #{tpu_custom_call.1} parent=39 // pred_check
          %p238 = pneg %p44
        $region42: #{tpu_custom_call.1} parent=39 // pred_check_branch
          %240 = sbr.rel (%p238) target = $region44
        $region43: #{tpu_custom_call.1} parent=39 // pred_region
          %242 = dma.done %s234, 128
        $region44: #{tpu_custom_call.1} parent=39 // pred_fallthru
          _
        // Predicated region
        $region45: #{tpu_custom_call.1} parent=39 // pred_check
          %p243 = pneg %p65
        $region46: #{tpu_custom_call.1} parent=39 // pred_check_branch
          %245 = sbr.rel (%p243) target = $region48
        $region47: #{tpu_custom_call.1} parent=39 // pred_region
          %247 = dma.done [#allocation8], 256
        $region48: #{tpu_custom_call.1} parent=39 // pred_fallthru
          _
        // Predicated region
        $region49: #{tpu_custom_call.1} parent=39 // pred_check
          %p248 = pneg %p107
        $region50: #{tpu_custom_call.1} parent=39 // pred_check_branch
          %250 = sbr.rel (%p248) target = $region52
        $region51: #{tpu_custom_call.1} parent=39 // pred_region
          %252 = dma.done [#allocation8], 256
        $region52: #{tpu_custom_call.1} parent=39 // pred_fallthru
          _
        %s253 = sand.u32 %s31, 1
        %s254 = scalar_lea.sflag [#allocation5], %s253
        %s255 = sand.u32 %s31, 1
        %s256 = smul.addr %s255, 8
        %s257 = scalar_lea.vmem [#allocation4], %s256
        %p258 = pneg %p44
        %p259 = pneg %p41
        %p260 = pneg %p65
        %p261 = pneg %p62
        %p262 = pneg %p86
        %p263 = pneg %p83
        %p264 = pneg %p107
        %p265 = pneg %p104
        %p266 = pneg %p128
        %p267 = pneg %p125
        %p268 = pneg %p154
        %p269 = pneg %p151
        %s270 = sand.u32 %s141, 1
        %s271 = scalar_lea.sflag [#allocation6], %s270
        %s272 = sand.u32 %s141, 1
        %s273 = smul.addr %s272, 8
        %s274 = scalar_lea.vmem [#allocation10], %s273
        %v276 = vld [vmem:[%s237] sm:$0xff]
        %v277 = vpack.c.bf16 %v276, %v276
        %v278 = vld [vmem:[#allocation7] sm:$0xf]
        %v279 = vld [vmem:[#allocation7 + $0x4] sm:$0xf]
        %v280 = vld [vmem:[#allocation7 + $0x8] sm:$0xf]
        %v281 = vld [vmem:[#allocation7 + $0xc] sm:$0xf]
        %v282 = vld [vmem:[%s2] sm:$0x1]
        %v284 = vperm.slane %v282, 0
        %v290 = vunpack.c.l.b16 %v278
        %v291 = vunpack.c.l.b16 %v279
        %v292 = vunpack.c.l.b16 %v280
        %v293 = vunpack.c.l.b16 %v281
        %v294 = vpack.c.b16 %v291, %v290
        %v295 = vpack.c.b16 %v293, %v292
        %vm298 = vcmask 261120
        %v300 = vsel %vm298, %v277, 0
        %302 = vmatpush.bf16.msra.mxu0 0
        %303 = vmatpush.bf16.msra.mxu0 0
        %304 = vmatpush.bf16.msra.mxu0 0
        %305 = vmatpush.bf16.msra.mxu0 0
        %306 = vmatpush.bf16.msra.mxu0 0
        %307 = vmatpush.bf16.msra.mxu0 0
        %308 = vmatpush.bf16.msra.mxu0 %v295
        %309 = vmatpush.bf16.msra.mxu0 %v294
        %310 = vmatmul.bf16.gmra.mxu0 %v300
        %v311 = vpop.f32.mrf.mxu0
        %v312 = vadd.f32 %v284, %v311
        %v313 = vpop.f32.mrf.mxu0
        %314 = vdwg.mxu0
        %v315 = vpack.c.bf16 %v312, %v312
        %vm316 = vcmask 781312
        %317 = vst.msk [vmem:[#allocation2] sm:$0xf] %vm316, %v315
        %v318 = vld [vmem:[#allocation2] sm:$0xf]
        %v320 = vunpack.c.l.b16 %v318
        %v321 = vpack.c.b16 %v320, %v320
        %322 = vrot.lane.b32.xlu0 %v321, 96
        %v323 = vpop.permute.xlu0 %322
        %vm324 = vcmask 64512
        %v326 = vsel %vm324, %v318, 0
        %v329 = vsel %vm324, %v323, 0
        %331 = vmatpush.bf16.xpose.msra.mxu0 0
        %332 = vmatpush.bf16.xpose.msra.mxu0 0
        %333 = vmatpush.bf16.xpose.msra.mxu0 0
        %334 = vmatpush.bf16.xpose.msra.mxu0 0
        %335 = vmatpush.bf16.xpose.msra.mxu0 0
        %336 = vmatpush.bf16.xpose.msra.mxu0 0
        %337 = vmatpush.bf16.xpose.msra.mxu0 0
        %338 = vmatpush.bf16.xpose.msra.mxu0 %v329
        %339 = vmatmul.bf16.gmra.mxu0 %v326
        %v340 = vpop.f32.mrf.mxu0
        %v341 = vadd.f32 0.0, %v340
        %v342 = vpop.f32.mrf.mxu0
        %343 = vdwg.mxu0
        %v344 = vsel %vm324, %v341, -inf
        %345 = vmax.xlane.f32.xlu0 %v344
        %v346 = vpop.xlane.xlu0 %345
        %v347 = vsub.f32 %v341, %v346
        %v348 = vmul.f32 %v347, 1.442695
        %v349 = vpow.pop %v348
        %v350 = vsel %vm324, %v349, 0.0
        %351 = vadd.xlane.f32.xlu0 %v350
        %v352 = vpop.xlane.xlu0 %351
        %v353 = vmul.f32 %v352, 5.656854
        %v354 = vrcp.pop %v353
        %v355 = vmul.f32 %v353, %v354
        %v356 = vsub.f32 1.0, %v355
        %v357 = vmul.f32 %v354, %v356
        %v358 = vadd.f32 %v354, %v357
        %vm359 = vweird.f32 %v353
        %vm360 = vweird.f32 %v354
        %vm361 = vmor %vm359, %vm360
        %v362 = vsel %vm361, %v354, %v358
        %v363 = vand.u32 2147483647, %v353
        %vm364 = vcmp.eq.f32.partialorder %v363, 8.507059e+37
        %v365 = vand.u32 %v353, 2147483648
        %v366 = vor.u32 1.1754944e-38, %v365
        %v367 = vsel %vm364, %v366, %v362
        %v368 = vmul.f32 %v349, %v367
        %v369 = vpack.c.bf16 %v368, %v368
        %370 = vrot.lane.b32.xlu0 %v321, 64
        %v371 = vpop.permute.xlu0 %370
        %v373 = vsel %vm324, %v369, 0
        %vm375 = vcmask 1043456
        %v377 = vsel %vm375, %v371, 0
        %379 = vmatpush.bf16.msra.mxu0 0
        %380 = vmatpush.bf16.msra.mxu0 0
        %381 = vmatpush.bf16.msra.mxu0 0
        %382 = vmatpush.bf16.msra.mxu0 0
        %383 = vmatpush.bf16.msra.mxu0 0
        %384 = vmatpush.bf16.msra.mxu0 0
        %385 = vmatpush.bf16.msra.mxu0 0
        %386 = vmatpush.bf16.msra.mxu0 %v377
        %387 = vmatmul.bf16.gmra.mxu0 %v373
        %v388 = vpop.f32.mrf.mxu0
        %v389 = vadd.f32 0.0, %v388
        %v390 = vpop.f32.mrf.mxu0
        %391 = vdwg.mxu0
        %392 = vrot.lane.b32.xlu0 %v321, 120
        %v393 = vpop.permute.xlu0 %392
        %394 = vrot.lane.b32.xlu0 %v321, 88
        %v395 = vpop.permute.xlu0 %394
        %v397 = vsel %vm324, %v393, 0
        %v400 = vsel %vm324, %v395, 0
        %402 = vmatpush.bf16.xpose.msra.mxu0 0
        %403 = vmatpush.bf16.xpose.msra.mxu0 0
        %404 = vmatpush.bf16.xpose.msra.mxu0 0
        %405 = vmatpush.bf16.xpose.msra.mxu0 0
        %406 = vmatpush.bf16.xpose.msra.mxu0 0
        %407 = vmatpush.bf16.xpose.msra.mxu0 0
        %408 = vmatpush.bf16.xpose.msra.mxu0 0
        %409 = vmatpush.bf16.xpose.msra.mxu0 %v400
        %410 = vmatmul.bf16.gmra.mxu0 %v397
        %v411 = vpop.f32.mrf.mxu0
        %v412 = vadd.f32 0.0, %v411
        %v413 = vpop.f32.mrf.mxu0
        %414 = vdwg.mxu0
        %v415 = vsel %vm324, %v412, -inf
        %416 = vmax.xlane.f32.xlu0 %v415
        %v417 = vpop.xlane.xlu0 %416
        %v418 = vsub.f32 %v412, %v417
        %v419 = vmul.f32 %v418, 1.442695
        %v420 = vpow.pop %v419
        %v421 = vsel %vm324, %v420, 0.0
        %422 = vadd.xlane.f32.xlu0 %v421
        %v423 = vpop.xlane.xlu0 %422
        %v424 = vmul.f32 %v423, 5.656854
        %v425 = vrcp.pop %v424
        %v426 = vmul.f32 %v424, %v425
        %v427 = vsub.f32 1.0, %v426
        %v428 = vmul.f32 %v425, %v427
        %v429 = vadd.f32 %v425, %v428
        %vm430 = vweird.f32 %v424
        %vm431 = vweird.f32 %v425
        %vm432 = vmor %vm430, %vm431
        %v433 = vsel %vm432, %v425, %v429
        %v434 = vand.u32 2147483647, %v424
        %vm435 = vcmp.eq.f32.partialorder %v434, 8.507059e+37
        %v436 = vand.u32 %v424, 2147483648
        %v437 = vor.u32 1.1754944e-38, %v436
        %v438 = vsel %vm435, %v437, %v433
        %v439 = vmul.f32 %v420, %v438
        %v440 = vpack.c.bf16 %v439, %v439
        %441 = vrot.lane.b32.xlu0 %v321, 56
        %v442 = vpop.permute.xlu0 %441
        %v444 = vsel %vm324, %v440, 0
        %v447 = vsel %vm375, %v442, 0
        %449 = vmatpush.bf16.msra.mxu0 0
        %450 = vmatpush.bf16.msra.mxu0 0
        %451 = vmatpush.bf16.msra.mxu0 0
        %452 = vmatpush.bf16.msra.mxu0 0
        %453 = vmatpush.bf16.msra.mxu0 0
        %454 = vmatpush.bf16.msra.mxu0 0
        %455 = vmatpush.bf16.msra.mxu0 0
        %456 = vmatpush.bf16.msra.mxu0 %v447
        %457 = vmatmul.bf16.gmra.mxu0 %v444
        %v458 = vpop.f32.mrf.mxu0
        %v459 = vadd.f32 0.0, %v458
        %v460 = vpop.f32.mrf.mxu0
        %461 = vdwg.mxu0
        %462 = vrot.lane.b32.xlu0 %v321, 112
        %v463 = vpop.permute.xlu0 %462
        %464 = vrot.lane.b32.xlu0 %v321, 80
        %v465 = vpop.permute.xlu0 %464
        %v467 = vsel %vm324, %v463, 0
        %v470 = vsel %vm324, %v465, 0
        %472 = vmatpush.bf16.xpose.msra.mxu0 0
        %473 = vmatpush.bf16.xpose.msra.mxu0 0
        %474 = vmatpush.bf16.xpose.msra.mxu0 0
        %475 = vmatpush.bf16.xpose.msra.mxu0 0
        %476 = vmatpush.bf16.xpose.msra.mxu0 0
        %477 = vmatpush.bf16.xpose.msra.mxu0 0
        %478 = vmatpush.bf16.xpose.msra.mxu0 0
        %479 = vmatpush.bf16.xpose.msra.mxu0 %v470
        %480 = vmatmul.bf16.gmra.mxu0 %v467
        %v481 = vpop.f32.mrf.mxu0
        %v482 = vadd.f32 0.0, %v481
        %v483 = vpop.f32.mrf.mxu0
        %484 = vdwg.mxu0
        %v485 = vsel %vm324, %v482, -inf
        %486 = vmax.xlane.f32.xlu0 %v485
        %v487 = vpop.xlane.xlu0 %486
        %v488 = vsub.f32 %v482, %v487
        %v489 = vmul.f32 %v488, 1.442695
        %v490 = vpow.pop %v489
        %v491 = vsel %vm324, %v490, 0.0
        %492 = vadd.xlane.f32.xlu0 %v491
        %v493 = vpop.xlane.xlu0 %492
        %v494 = vmul.f32 %v493, 5.656854
        %v495 = vrcp.pop %v494
        %v496 = vmul.f32 %v494, %v495
        %v497 = vsub.f32 1.0, %v496
        %v498 = vmul.f32 %v495, %v497
        %v499 = vadd.f32 %v495, %v498
        %vm500 = vweird.f32 %v494
        %vm501 = vweird.f32 %v495
        %vm502 = vmor %vm500, %vm501
        %v503 = vsel %vm502, %v495, %v499
        %v504 = vand.u32 2147483647, %v494
        %vm505 = vcmp.eq.f32.partialorder %v504, 8.507059e+37
        %v506 = vand.u32 %v494, 2147483648
        %v507 = vor.u32 1.1754944e-38, %v506
        %v508 = vsel %vm505, %v507, %v503
        %v509 = vmul.f32 %v490, %v508
        %v510 = vpack.c.bf16 %v509, %v509
        %511 = vrot.lane.b32.xlu0 %v321, 48
        %v512 = vpop.permute.xlu0 %511
        %v514 = vsel %vm324, %v510, 0
        %v517 = vsel %vm375, %v512, 0
        %519 = vmatpush.bf16.msra.mxu0 0
        %520 = vmatpush.bf16.msra.mxu0 0
        %521 = vmatpush.bf16.msra.mxu0 0
        %522 = vmatpush.bf16.msra.mxu0 0
        %523 = vmatpush.bf16.msra.mxu0 0
        %524 = vmatpush.bf16.msra.mxu0 0
        %525 = vmatpush.bf16.msra.mxu0 0
        %526 = vmatpush.bf16.msra.mxu0 %v517
        %527 = vmatmul.bf16.gmra.mxu0 %v514
        %v528 = vpop.f32.mrf.mxu0
        %v529 = vadd.f32 0.0, %v528
        %v530 = vpop.f32.mrf.mxu0
        %531 = vdwg.mxu0
        %532 = vrot.lane.b32.xlu0 %v321, 104
        %v533 = vpop.permute.xlu0 %532
        %534 = vrot.lane.b32.xlu0 %v321, 72
        %v535 = vpop.permute.xlu0 %534
        %v537 = vsel %vm324, %v533, 0
        %v540 = vsel %vm324, %v535, 0
        %542 = vmatpush.bf16.xpose.msra.mxu0 0
        %543 = vmatpush.bf16.xpose.msra.mxu0 0
        %544 = vmatpush.bf16.xpose.msra.mxu0 0
        %545 = vmatpush.bf16.xpose.msra.mxu0 0
        %546 = vmatpush.bf16.xpose.msra.mxu0 0
        %547 = vmatpush.bf16.xpose.msra.mxu0 0
        %548 = vmatpush.bf16.xpose.msra.mxu0 0
        %549 = vmatpush.bf16.xpose.msra.mxu0 %v540
        %550 = vmatmul.bf16.gmra.mxu0 %v537
        %v551 = vpop.f32.mrf.mxu0
        %v552 = vadd.f32 0.0, %v551
        %v553 = vpop.f32.mrf.mxu0
        %554 = vdwg.mxu0
        %v555 = vsel %vm324, %v552, -inf
        %556 = vmax.xlane.f32.xlu0 %v555
        %v557 = vpop.xlane.xlu0 %556
        %v558 = vsub.f32 %v552, %v557
        %v559 = vmul.f32 %v558, 1.442695
        %v560 = vpow.pop %v559
        %v561 = vsel %vm324, %v560, 0.0
        %562 = vadd.xlane.f32.xlu0 %v561
        %v563 = vpop.xlane.xlu0 %562
        %v564 = vmul.f32 %v563, 5.656854
        %v565 = vrcp.pop %v564
        %v566 = vmul.f32 %v564, %v565
        %v567 = vsub.f32 1.0, %v566
        %v568 = vmul.f32 %v565, %v567
        %v569 = vadd.f32 %v565, %v568
        %vm570 = vweird.f32 %v564
        %vm571 = vweird.f32 %v565
        %vm572 = vmor %vm570, %vm571
        %v573 = vsel %vm572, %v565, %v569
        %v574 = vand.u32 2147483647, %v564
        %vm575 = vcmp.eq.f32.partialorder %v574, 8.507059e+37
        %v576 = vand.u32 %v564, 2147483648
        %v577 = vor.u32 1.1754944e-38, %v576
        %v578 = vsel %vm575, %v577, %v573
        %v579 = vmul.f32 %v560, %v578
        %v580 = vpack.c.bf16 %v579, %v579
        %581 = vrot.lane.b32.xlu0 %v321, 40
        %v582 = vpop.permute.xlu0 %581
        %v584 = vsel %vm324, %v580, 0
        %v587 = vsel %vm375, %v582, 0
        %589 = vmatpush.bf16.msra.mxu0 0
        %590 = vmatpush.bf16.msra.mxu0 0
        %591 = vmatpush.bf16.msra.mxu0 0
        %592 = vmatpush.bf16.msra.mxu0 0
        %593 = vmatpush.bf16.msra.mxu0 0
        %594 = vmatpush.bf16.msra.mxu0 0
        %595 = vmatpush.bf16.msra.mxu0 0
        %596 = vmatpush.bf16.msra.mxu0 %v587
        %597 = vmatmul.bf16.gmra.mxu0 %v584
        %v598 = vpop.f32.mrf.mxu0
        %v599 = vadd.f32 0.0, %v598
        %v600 = vpop.f32.mrf.mxu0
        %601 = vdwg.mxu0
        %603 = vrot.lane.b32.xlu0 %v459, 8
        %v604 = vpop.permute.xlu0 %603
        %607 = vrot.lane.b32.xlu0 %v529, 16
        %v608 = vpop.permute.xlu0 %607
        %611 = vrot.lane.b32.xlu0 %v599, 24
        %v612 = vpop.permute.xlu0 %611
        %v614 = vsel %vm324, %v389, %v604
        %vm615 = vcmask 130048
        %v616 = vsel %vm615, %v614, %v608
        %vm617 = vcmask 195584
        %v618 = vsel %vm617, %v616, %v612
        %v619 = vpack.c.bf16 %v618, %v618
        %vm620 = vcmask 257024
        %621 = vst.msk [vmem:[#allocation3] sm:$0xf] %vm620, %v619
        %v622 = vld [vmem:[#allocation3] sm:$0xf]
        %v623 = vld [vmem:[#allocation9] sm:$0xf]
        %v624 = vld [vmem:[#allocation9 + $0x4] sm:$0xf]
        %v625 = vld [vmem:[#allocation9 + $0x8] sm:$0xf]
        %v626 = vld [vmem:[#allocation9 + $0xc] sm:$0xf]
        %v627 = vld [vmem:[%s4] sm:$0x1]
        %v629 = vperm.slane %v627, 0
        %v635 = vunpack.c.l.b16 %v623
        %v636 = vunpack.c.l.b16 %v624
        %v637 = vunpack.c.l.b16 %v625
        %v638 = vunpack.c.l.b16 %v626
        %v639 = vpack.c.b16 %v636, %v635
        %v640 = vpack.c.b16 %v638, %v637
        %v644 = vsel %vm298, %v622, 0
        %646 = vmatpush.bf16.msra.mxu0 0
        %647 = vmatpush.bf16.msra.mxu0 0
        %648 = vmatpush.bf16.msra.mxu0 0
        %649 = vmatpush.bf16.msra.mxu0 0
        %650 = vmatpush.bf16.msra.mxu0 0
        %651 = vmatpush.bf16.msra.mxu0 0
        %652 = vmatpush.bf16.msra.mxu0 %v640
        %653 = vmatpush.bf16.msra.mxu0 %v639
        %654 = vmatmul.bf16.gmra.mxu0 %v644
        %v655 = vpop.f32.mrf.mxu0
        %v656 = vadd.f32 %v629, %v655
        %v657 = vpop.f32.mrf.mxu0
        %658 = vdwg.mxu0
        %659 = vst.msk [vmem:[%s274] sm:$0xff] %vm298, %v656
        %s660 = sand.u32 %s141, 1
        %s661 = scalar_lea.sflag [#allocation6], %s660
        %s662 = sand.u32 %s141, 1
        %s663 = smul.addr %s662, 8
        %s664 = scalar_lea.vmem [#allocation10], %s663
        // Predicated region
        $region53: #{tpu_custom_call.1} parent=39 // pred_check
          %p665 = pneg %p151
        $region54: #{tpu_custom_call.1} parent=39 // pred_check_branch
          %667 = sbr.rel (%p665) target = $region56
        $region55: #{tpu_custom_call.1} parent=39 // pred_region
          %669 = vsyncadd %s661, 0
          %s670 = smul.addr %s23, 8
          %s671 = scalar_lea.hbm %s5, %s670
          %s673 = sshll.u32 %s664, 4
          %s674 = int_to_ptr.vmem [resolvable:$true] %s673
          %s675 = sshll.u32 %s671, 4
          %s676 = int_to_ptr.hbm [resolvable:$true] %s675
          %678 = dma.vmem_to_hbm [thread:$0]  %s674, 128, %s676, %s661
        $region56: #{tpu_custom_call.1} parent=39 // pred_fallthru
          _
      $region40: #{tpu_custom_call.1} parent=5 // pred_fallthru
        _
      %p679 = scmp.le.s32.totalorder 2, %s18
      // Predicated region
      $region57: #{tpu_custom_call.1} parent=5 // pred_check
        %p680 = pneg %p679
      $region58: #{tpu_custom_call.1} parent=5 // pred_check_branch
        %682 = sbr.rel (%p680) target = $region60
      $region59: #{tpu_custom_call.1} parent=5 // pred_region
        %s683 = ssub.s32 %s18, 2
        // Predicated region
        $region61: #{tpu_custom_call.1} parent=59 // pred_check
          %p684 = pneg %p157
        $region62: #{tpu_custom_call.1} parent=59 // pred_check_branch
          %686 = sbr.rel (%p684) target = $region64
        $region63: #{tpu_custom_call.1} parent=59 // pred_region
          %s687 = sand.u32 %s142, 1
          %s688 = scalar_lea.sflag [#allocation6], %s687
          %s689 = sand.u32 %s142, 1
          %s690 = smul.addr %s689, 8
          %s691 = scalar_lea.vmem [#allocation10], %s690
          %693 = dma.done %s688, 128
        $region64: #{tpu_custom_call.1} parent=59 // pred_fallthru
          _
      $region60: #{tpu_custom_call.1} parent=5 // pred_fallthru
        _
    $region6: #{tpu_custom_call.1} parent=1 // loop_footer
      %s22 = sadd.s32 1, %s18
    $region7: #{tpu_custom_call.1} parent=1 // loop_footer_branch
      %17 = sbr.rel target = $region3
    $region8: #{tpu_custom_call.1} parent=1 // loop_exit
      _
    %694 = vsyncpa [#allocation5], 1
    %s695 = scalar_lea.sflag [#allocation5], 1
    %696 = vsyncpa %s695, 1
    %697 = vsyncpa [#allocation8], 1
    %698 = vsyncpa [#allocation6], 1
    %s699 = scalar_lea.sflag [#allocation6], 1
    %700 = vsyncpa %s699, 1

</llo_original>
